<compile_context>
chip_gen: v5e
topology: v5e:2x2
jax: 0.10.0
libtpu: 0.0.40
codegen_flags: <defaults>
</compile_context>

<pallas_src>
import functools

import jax
import jax.numpy as jnp
from jax.experimental import pallas as pl
from jax.experimental.pallas import tpu as pltpu


CPAD = 16   # intermediate-channel pad (real channels are 9/9/10)


def _round_up(n, m):
    return ((n + m - 1) // m) * m


# ----------------------------------------------------------------------------
# Fused kernel: one batch element per grid step.
# ----------------------------------------------------------------------------
def _conv_taps(act, w_ref, b_ref, ksize, l_out):
    """Valid Conv1d as K shifted-slice MXU matmuls + bias + ReLU.
    act: (L_in, Cin) value; w_ref: (K, Cin, Cout); b_ref: (1, Cout)."""
    acc = jnp.zeros((l_out, w_ref.shape[2]), jnp.float32)
    for k in range(ksize):
        acc = acc + jnp.dot(act[k:k + l_out, :], w_ref[k],
                            preferred_element_type=jnp.float32)
    return jnp.maximum(acc + b_ref[...], 0.0)


def _encoder_kernel(x_ref, w1c_ref, b1c_ref, w2c_ref, b2c_ref, w3c_ref, b3c_ref,
                    w1r_ref, b1l_ref, wh_ref, bh_ref, out_ref, *, l1, l2, l3):
    x = x_ref[0]                                     # (L0, c_in) channels-last
    a1 = _conv_taps(x, w1c_ref, b1c_ref, 9, l1)      # (L1, CPAD)
    a2 = _conv_taps(a1, w2c_ref, b2c_ref, 9, l2)     # (L2, CPAD)
    a3 = _conv_taps(a2, w3c_ref, b3c_ref, 11, l3)    # (L3, CPAD)

    # w1 linear over the channel-major torch flatten; the flatten permutation
    # is baked into w1r's (tap, channel, out) layout, so contract tap-by-tap.
    # (Kept as l3 small matmuls: a (L3,CPAD)->(1,L3*CPAD) flatten would cross
    # the tiled sublane->lane boundary — not worth the Mosaic-reshape risk.)
    h = b1l_ref[...]                                 # (1, HPAD)
    for t in range(l3):
        h = h + jnp.dot(a3[t:t + 1, :], w1r_ref[t],
                        preferred_element_type=jnp.float32)
    h = jnp.maximum(h, 0.0)

    # Fused mean||logvar head: single matmul, single output block.
    out_ref[0] = (jnp.dot(h, wh_ref[...], preferred_element_type=jnp.float32)
                  + bh_ref[...])


# ----------------------------------------------------------------------------
# Forward wrapper (single pallas_call)
# ----------------------------------------------------------------------------
def cnn_encoder_forward(packed, x, latent_dim):
    """x: (B, decision_dim, max_len) float32 -> (z_mean, z_log_var)."""
    B, c_in, L0 = x.shape
    L1 = L0 - 9 + 1
    L2 = L1 - 9 + 1
    L3 = L2 - 11 + 1
    HPAD = packed["w1r"].shape[2]
    OUT2 = packed["wh"].shape[1]          # 2 * latent_dim

    # Only per-call data prep: NCL -> (B, L, C) channels-last.  No padding —
    # the conv1 weight keeps the real input-channel count as contraction dim.
    x_t = jnp.transpose(x, (0, 2, 1))

    weights = [packed[k] for k in ("w1c", "b1c", "w2c", "b2c", "w3c", "b3c",
                                   "w1r", "b1l", "wh", "bh")]

    def full_spec(a):
        nd = a.ndim
        return pl.BlockSpec(a.shape, lambda b, _nd=nd: (0,) * _nd)

    flops = 2 * B * (9 * L1 * c_in * CPAD
                     + 9 * L2 * CPAD * CPAD
                     + 11 * L3 * CPAD * CPAD
                     + L3 * CPAD * HPAD
                     + HPAD * OUT2)
    bytes_accessed = 4 * (int(x_t.size) + sum(int(w.size) for w in weights)
                          + B * OUT2)

    out = pl.pallas_call(
        functools.partial(_encoder_kernel, l1=L1, l2=L2, l3=L3),
        out_shape=jax.ShapeDtypeStruct((B, 1, OUT2), jnp.float32),
        grid=(B,),
        in_specs=[pl.BlockSpec((1, L0, c_in), lambda b: (b, 0, 0))]
                 + [full_spec(w) for w in weights],
        out_specs=pl.BlockSpec((1, 1, OUT2), lambda b: (b, 0, 0)),
        compiler_params=pltpu.CompilerParams(
            dimension_semantics=("parallel",)),
        cost_estimate=pl.CostEstimate(flops=flops, transcendentals=0,
                                      bytes_accessed=bytes_accessed),
    )(x_t, *weights)

    return out[:, 0, :latent_dim], out[:, 0, latent_dim:2 * latent_dim]


# ----------------------------------------------------------------------------
# Parameters: raw (PyTorch layout, for the reference) + init-time packing.
# ----------------------------------------------------------------------------
def init_raw_params(key, max_len, latent_dim, decision_dim):
    last_conv_size = max_len - 9 + 1 - 9 + 1 - 11 + 1
    ks = jax.random.split(key, 6)

    def w(k, shape, scale=0.1):
        return (scale * jax.random.normal(k, shape)).astype(jnp.float32)

    raw = {
        "conv1_w": w(ks[0], (9, decision_dim, 9)),
        "conv1_b": jnp.linspace(-0.1, 0.1, 9, dtype=jnp.float32),
        "conv2_w": w(ks[1], (9, 9, 9)),
        "conv2_b": jnp.linspace(-0.05, 0.05, 9, dtype=jnp.float32),
        "conv3_w": w(ks[2], (10, 9, 11)),
        "conv3_b": jnp.linspace(-0.1, 0.1, 10, dtype=jnp.float32),
        "w1_w": w(ks[3], (435, last_conv_size * 10)),      # PyTorch Linear: (out, in)
        "w1_b": jnp.linspace(-0.02, 0.02, 435, dtype=jnp.float32),
        "mean_w": w(ks[4], (latent_dim, 435)),
        "mean_b": jnp.linspace(-0.1, 0.1, latent_dim, dtype=jnp.float32),
        "logvar_w": w(ks[5], (latent_dim, 435)),
        "logvar_b": jnp.linspace(-0.1, 0.1, latent_dim, dtype=jnp.float32),
    }
    return raw, last_conv_size


def pack_params(raw, latent_dim):
    """One-time reordering / transposition / minimal zero-padding.

    Zero-padded bias/weight lanes keep padded channels exactly 0 through the
    ReLUs, so the padding never leaks into the real outputs.
    """
    C3 = raw["conv3_w"].shape[0]                # 10
    H = raw["w1_w"].shape[0]                    # 435
    L3 = raw["w1_w"].shape[1] // C3             # last_conv_size
    HPAD = _round_up(H, 8)                      # 440 (sublane quantum), not 512
    lat = raw["mean_w"].shape[0]

    def conv_pack(w, cin_pad):                  # (Cout, Cin, K) -> (K, cin_pad, CPAD)
        ksize = w.shape[2]
        wt = jnp.transpose(w, (2, 1, 0))        # (K, Cin, Cout)
        out = jnp.zeros((ksize, cin_pad, CPAD), jnp.float32)
        return out.at[:, :wt.shape[1], :wt.shape[2]].set(wt)

    def vec_pack(b, n):
        return jnp.zeros((1, n), jnp.float32).at[0, :b.shape[0]].set(b)

    # w1 absorbs the channel-major torch flatten: (H, C3*L3) -> (L3, CPAD, HPAD)
    w1r = jnp.transpose(raw["w1_w"].reshape(H, C3, L3), (2, 1, 0))   # (L3, C3, H)
    w1r_pad = jnp.zeros((L3, CPAD, HPAD), jnp.float32).at[:, :C3, :H].set(w1r)

    # Fused heads: wm || wv -> (HPAD, 2*lat); bm || bv -> (1, 2*lat)
    wh = jnp.zeros((HPAD, 2 * lat), jnp.float32)
    wh = wh.at[:H, :lat].set(raw["mean_w"].T)
    wh = wh.at[:H, lat:].set(raw["logvar_w"].T)
    bh = jnp.concatenate([raw["mean_b"], raw["logvar_b"]])[None, :]

    cin = raw["conv1_w"].shape[1]               # real input channels, unpadded
    return {
        "w1c": conv_pack(raw["conv1_w"], cin), "b1c": vec_pack(raw["conv1_b"], CPAD),
        "w2c": conv_pack(raw["conv2_w"], CPAD), "b2c": vec_pack(raw["conv2_b"], CPAD),
        "w3c": conv_pack(raw["conv3_w"], CPAD), "b3c": vec_pack(raw["conv3_b"], CPAD),
        "w1r": w1r_pad, "b1l": vec_pack(raw["w1_b"], HPAD),
        "wh": wh, "bh": bh,
    }


# ----------------------------------------------------------------------------
# Pure-JAX reference (lax.conv) for correctness checking
# ----------------------------------------------------------------------------
def ref_forward(raw, x):
    def conv(x, w, b):
        y = jax.lax.conv_general_dilated(
            x, w, window_strides=(1,), padding="VALID",
            dimension_numbers=("NCH", "OIH", "NCH"))
        return y + b[None, :, None]

    h1 = jax.nn.relu(conv(x, raw["conv1_w"], raw["conv1_b"]))
    h2 = jax.nn.relu(conv(h1, raw["conv2_w"], raw["conv2_b"]))
    h3 = jax.nn.relu(conv(h2, raw["conv3_w"], raw["conv3_b"]))
    flatten = h3.reshape(x.shape[0], -1)
    h = jax.nn.relu(flatten @ raw["w1_w"].T + raw["w1_b"])
    z_mean = h @ raw["mean_w"].T + raw["mean_b"]
    z_log_var = h @ raw["logvar_w"].T + raw["logvar_b"]
    return z_mean, z_log_var


if __name__ == "__main__":
    # Small shapes consistent with the module:
    # x: (batch=2, decision_dim=8, max_len=32); last_conv_size = 32 - 26 = 6
    batch, decision_dim, max_len, latent_dim = 2, 8, 32, 16

    key = jax.random.PRNGKey(0)
    k_params, k_x = jax.random.split(key)
    raw, last_conv_size = init_raw_params(k_params, max_len, latent_dim, decision_dim)
    packed = pack_params(raw, latent_dim)
    x = jax.random.normal(k_x, (batch, decision_dim, max_len), dtype=jnp.float32)

    fwd = jax.jit(functools.partial(cnn_encoder_forward, latent_dim=latent_dim))
    z_mean, z_log_var = fwd(packed, x)
    jax.block_until_ready((z_mean, z_log_var))

    zm_ref, zl_ref = ref_forward(raw, x)
    assert z_mean.shape == (batch, latent_dim) and z_log_var.shape == (batch, latent_dim)
    assert jnp.allclose(z_mean, zm_ref, atol=1e-4, rtol=1e-4), \
        float(jnp.max(jnp.abs(z_mean - zm_ref)))
    assert jnp.allclose(z_log_var, zl_ref, atol=1e-4, rtol=1e-4), \
        float(jnp.max(jnp.abs(z_log_var - zl_ref)))

    print("KERNEL_OK")
</pallas_src>

<mosaic_0001>
module attributes {stable_mosaic.version = 11 : i64} {
  func.func @_encoder_kernel(%arg0: i32, %arg1: memref<1x32x8xf32, #tpu.memory_space<vmem>>, %arg2: memref<9x8x16xf32, #tpu.memory_space<vmem>>, %arg3: memref<1x16xf32, #tpu.memory_space<vmem>>, %arg4: memref<9x16x16xf32, #tpu.memory_space<vmem>>, %arg5: memref<1x16xf32, #tpu.memory_space<vmem>>, %arg6: memref<11x16x16xf32, #tpu.memory_space<vmem>>, %arg7: memref<1x16xf32, #tpu.memory_space<vmem>>, %arg8: memref<6x16x440xf32, #tpu.memory_space<vmem>>, %arg9: memref<1x440xf32, #tpu.memory_space<vmem>>, %arg10: memref<440x32xf32, #tpu.memory_space<vmem>>, %arg11: memref<1x32xf32, #tpu.memory_space<vmem>>, %arg12: memref<1x1x32xf32, #tpu.memory_space<vmem>>) attributes {dimension_semantics = [#tpu.dimension_semantics<parallel>], iteration_bounds = array<i64: 2>, scalar_prefetch = 0 : i64, scratch_operands = 0 : i64, tpu.core_type = #tpu.core_type<tc>, window_params = [{transform_indices = @transform_0, window_bounds = array<i64: 1, 32, 8>}, {pipeline_mode = #tpu.pipeline_mode<synchronous>, transform_indices = @transform_1, window_bounds = array<i64: 9, 8, 16>}, {pipeline_mode = #tpu.pipeline_mode<synchronous>, transform_indices = @transform_2, window_bounds = array<i64: 1, 16>}, {pipeline_mode = #tpu.pipeline_mode<synchronous>, transform_indices = @transform_3, window_bounds = array<i64: 9, 16, 16>}, {pipeline_mode = #tpu.pipeline_mode<synchronous>, transform_indices = @transform_4, window_bounds = array<i64: 1, 16>}, {pipeline_mode = #tpu.pipeline_mode<synchronous>, transform_indices = @transform_5, window_bounds = array<i64: 11, 16, 16>}, {pipeline_mode = #tpu.pipeline_mode<synchronous>, transform_indices = @transform_6, window_bounds = array<i64: 1, 16>}, {pipeline_mode = #tpu.pipeline_mode<synchronous>, transform_indices = @transform_7, window_bounds = array<i64: 6, 16, 440>}, {pipeline_mode = #tpu.pipeline_mode<synchronous>, transform_indices = @transform_8, window_bounds = array<i64: 1, 440>}, {pipeline_mode = #tpu.pipeline_mode<synchronous>, transform_indices = @transform_9, window_bounds = array<i64: 440, 32>}, {pipeline_mode = #tpu.pipeline_mode<synchronous>, transform_indices = @transform_10, window_bounds = array<i64: 1, 32>}, {transform_indices = @transform_11, window_bounds = array<i64: 1, 1, 32>}]} {
    %c0 = arith.constant 0 : index
    %c0_0 = arith.constant 0 : index
    %c0_1 = arith.constant 0 : index
    %0 = vector.load %arg1[%c0, %c0_0, %c0_1] : memref<1x32x8xf32, #tpu.memory_space<vmem>>, vector<1x32x8xf32>
    %1 = vector.shape_cast %0 : vector<1x32x8xf32> to vector<32x8xf32>
    %cst = arith.constant 0.000000e+00 : f32
    %2 = vector.broadcast %cst : f32 to vector<24x16xf32>
    %3 = vector.extract_strided_slice %1 {offsets = [0, 0], sizes = [24, 8], strides = [1, 1]} : vector<32x8xf32> to vector<24x8xf32>
    %c0_2 = arith.constant 0 : index
    %c0_3 = arith.constant 0 : index
    %c0_4 = arith.constant 0 : index
    %4 = vector.load %arg2[%c0_2, %c0_3, %c0_4] : memref<9x8x16xf32, #tpu.memory_space<vmem>>, vector<1x8x16xf32>
    %5 = vector.shape_cast %4 : vector<1x8x16xf32> to vector<8x16xf32>
    %cst_5 = arith.constant dense<0.000000e+00> : vector<24x16xf32>
    %6 = tpu.matmul %3, %5, %cst_5 {dimension_numbers = #tpu.dot_dimension_numbers<[1], [0], [0], [1], [0, 0, 1, 1], [], []>} : vector<24x8xf32>, vector<8x16xf32>, vector<24x16xf32> -> vector<24x16xf32>
    %7 = arith.addf %2, %6 : vector<24x16xf32>
    %8 = vector.extract_strided_slice %1 {offsets = [1, 0], sizes = [24, 8], strides = [1, 1]} : vector<32x8xf32> to vector<24x8xf32>
    %c1 = arith.constant 1 : index
    %c0_6 = arith.constant 0 : index
    %c0_7 = arith.constant 0 : index
    %9 = vector.load %arg2[%c1, %c0_6, %c0_7] : memref<9x8x16xf32, #tpu.memory_space<vmem>>, vector<1x8x16xf32>
    %10 = vector.shape_cast %9 : vector<1x8x16xf32> to vector<8x16xf32>
    %cst_8 = arith.constant dense<0.000000e+00> : vector<24x16xf32>
    %11 = tpu.matmul %8, %10, %cst_8 {dimension_numbers = #tpu.dot_dimension_numbers<[1], [0], [0], [1], [0, 0, 1, 1], [], []>} : vector<24x8xf32>, vector<8x16xf32>, vector<24x16xf32> -> vector<24x16xf32>
    %12 = arith.addf %7, %11 : vector<24x16xf32>
    %13 = vector.extract_strided_slice %1 {offsets = [2, 0], sizes = [24, 8], strides = [1, 1]} : vector<32x8xf32> to vector<24x8xf32>
    %c2 = arith.constant 2 : index
    %c0_9 = arith.constant 0 : index
    %c0_10 = arith.constant 0 : index
    %14 = vector.load %arg2[%c2, %c0_9, %c0_10] : memref<9x8x16xf32, #tpu.memory_space<vmem>>, vector<1x8x16xf32>
    %15 = vector.shape_cast %14 : vector<1x8x16xf32> to vector<8x16xf32>
    %cst_11 = arith.constant dense<0.000000e+00> : vector<24x16xf32>
    %16 = tpu.matmul %13, %15, %cst_11 {dimension_numbers = #tpu.dot_dimension_numbers<[1], [0], [0], [1], [0, 0, 1, 1], [], []>} : vector<24x8xf32>, vector<8x16xf32>, vector<24x16xf32> -> vector<24x16xf32>
    %17 = arith.addf %12, %16 : vector<24x16xf32>
    %18 = vector.extract_strided_slice %1 {offsets = [3, 0], sizes = [24, 8], strides = [1, 1]} : vector<32x8xf32> to vector<24x8xf32>
    %c3 = arith.constant 3 : index
    %c0_12 = arith.constant 0 : index
    %c0_13 = arith.constant 0 : index
    %19 = vector.load %arg2[%c3, %c0_12, %c0_13] : memref<9x8x16xf32, #tpu.memory_space<vmem>>, vector<1x8x16xf32>
    %20 = vector.shape_cast %19 : vector<1x8x16xf32> to vector<8x16xf32>
    %cst_14 = arith.constant dense<0.000000e+00> : vector<24x16xf32>
    %21 = tpu.matmul %18, %20, %cst_14 {dimension_numbers = #tpu.dot_dimension_numbers<[1], [0], [0], [1], [0, 0, 1, 1], [], []>} : vector<24x8xf32>, vector<8x16xf32>, vector<24x16xf32> -> vector<24x16xf32>
    %22 = arith.addf %17, %21 : vector<24x16xf32>
    %23 = vector.extract_strided_slice %1 {offsets = [4, 0], sizes = [24, 8], strides = [1, 1]} : vector<32x8xf32> to vector<24x8xf32>
    %c4 = arith.constant 4 : index
    %c0_15 = arith.constant 0 : index
    %c0_16 = arith.constant 0 : index
    %24 = vector.load %arg2[%c4, %c0_15, %c0_16] : memref<9x8x16xf32, #tpu.memory_space<vmem>>, vector<1x8x16xf32>
    %25 = vector.shape_cast %24 : vector<1x8x16xf32> to vector<8x16xf32>
    %cst_17 = arith.constant dense<0.000000e+00> : vector<24x16xf32>
    %26 = tpu.matmul %23, %25, %cst_17 {dimension_numbers = #tpu.dot_dimension_numbers<[1], [0], [0], [1], [0, 0, 1, 1], [], []>} : vector<24x8xf32>, vector<8x16xf32>, vector<24x16xf32> -> vector<24x16xf32>
    %27 = arith.addf %22, %26 : vector<24x16xf32>
    %28 = vector.extract_strided_slice %1 {offsets = [5, 0], sizes = [24, 8], strides = [1, 1]} : vector<32x8xf32> to vector<24x8xf32>
    %c5 = arith.constant 5 : index
    %c0_18 = arith.constant 0 : index
    %c0_19 = arith.constant 0 : index
    %29 = vector.load %arg2[%c5, %c0_18, %c0_19] : memref<9x8x16xf32, #tpu.memory_space<vmem>>, vector<1x8x16xf32>
    %30 = vector.shape_cast %29 : vector<1x8x16xf32> to vector<8x16xf32>
    %cst_20 = arith.constant dense<0.000000e+00> : vector<24x16xf32>
    %31 = tpu.matmul %28, %30, %cst_20 {dimension_numbers = #tpu.dot_dimension_numbers<[1], [0], [0], [1], [0, 0, 1, 1], [], []>} : vector<24x8xf32>, vector<8x16xf32>, vector<24x16xf32> -> vector<24x16xf32>
    %32 = arith.addf %27, %31 : vector<24x16xf32>
    %33 = vector.extract_strided_slice %1 {offsets = [6, 0], sizes = [24, 8], strides = [1, 1]} : vector<32x8xf32> to vector<24x8xf32>
    %c6 = arith.constant 6 : index
    %c0_21 = arith.constant 0 : index
    %c0_22 = arith.constant 0 : index
    %34 = vector.load %arg2[%c6, %c0_21, %c0_22] : memref<9x8x16xf32, #tpu.memory_space<vmem>>, vector<1x8x16xf32>
    %35 = vector.shape_cast %34 : vector<1x8x16xf32> to vector<8x16xf32>
    %cst_23 = arith.constant dense<0.000000e+00> : vector<24x16xf32>
    %36 = tpu.matmul %33, %35, %cst_23 {dimension_numbers = #tpu.dot_dimension_numbers<[1], [0], [0], [1], [0, 0, 1, 1], [], []>} : vector<24x8xf32>, vector<8x16xf32>, vector<24x16xf32> -> vector<24x16xf32>
    %37 = arith.addf %32, %36 : vector<24x16xf32>
    %38 = vector.extract_strided_slice %1 {offsets = [7, 0], sizes = [24, 8], strides = [1, 1]} : vector<32x8xf32> to vector<24x8xf32>
    %c7 = arith.constant 7 : index
    %c0_24 = arith.constant 0 : index
    %c0_25 = arith.constant 0 : index
    %39 = vector.load %arg2[%c7, %c0_24, %c0_25] : memref<9x8x16xf32, #tpu.memory_space<vmem>>, vector<1x8x16xf32>
    %40 = vector.shape_cast %39 : vector<1x8x16xf32> to vector<8x16xf32>
    %cst_26 = arith.constant dense<0.000000e+00> : vector<24x16xf32>
    %41 = tpu.matmul %38, %40, %cst_26 {dimension_numbers = #tpu.dot_dimension_numbers<[1], [0], [0], [1], [0, 0, 1, 1], [], []>} : vector<24x8xf32>, vector<8x16xf32>, vector<24x16xf32> -> vector<24x16xf32>
    %42 = arith.addf %37, %41 : vector<24x16xf32>
    %43 = vector.extract_strided_slice %1 {offsets = [8, 0], sizes = [24, 8], strides = [1, 1]} : vector<32x8xf32> to vector<24x8xf32>
    %c8 = arith.constant 8 : index
    %c0_27 = arith.constant 0 : index
    %c0_28 = arith.constant 0 : index
    %44 = vector.load %arg2[%c8, %c0_27, %c0_28] : memref<9x8x16xf32, #tpu.memory_space<vmem>>, vector<1x8x16xf32>
    %45 = vector.shape_cast %44 : vector<1x8x16xf32> to vector<8x16xf32>
    %cst_29 = arith.constant dense<0.000000e+00> : vector<24x16xf32>
    %46 = tpu.matmul %43, %45, %cst_29 {dimension_numbers = #tpu.dot_dimension_numbers<[1], [0], [0], [1], [0, 0, 1, 1], [], []>} : vector<24x8xf32>, vector<8x16xf32>, vector<24x16xf32> -> vector<24x16xf32>
    %47 = arith.addf %42, %46 : vector<24x16xf32>
    %c0_30 = arith.constant 0 : index
    %c0_31 = arith.constant 0 : index
    %48 = vector.load %arg3[%c0_30, %c0_31] : memref<1x16xf32, #tpu.memory_space<vmem>>, vector<1x16xf32>
    %49 = vector.broadcast %48 : vector<1x16xf32> to vector<24x16xf32>
    %50 = arith.addf %47, %49 : vector<24x16xf32>
    %cst_32 = arith.constant 0.000000e+00 : f32
    %51 = vector.broadcast %cst_32 : f32 to vector<24x16xf32>
    %52 = arith.maximumf %50, %51 : vector<24x16xf32>
    %cst_33 = arith.constant 0.000000e+00 : f32
    %53 = vector.broadcast %cst_33 : f32 to vector<16x16xf32>
    %54 = vector.extract_strided_slice %52 {offsets = [0, 0], sizes = [16, 16], strides = [1, 1]} : vector<24x16xf32> to vector<16x16xf32>
    %c0_34 = arith.constant 0 : index
    %c0_35 = arith.constant 0 : index
    %c0_36 = arith.constant 0 : index
    %55 = vector.load %arg4[%c0_34, %c0_35, %c0_36] : memref<9x16x16xf32, #tpu.memory_space<vmem>>, vector<1x16x16xf32>
    %56 = vector.shape_cast %55 : vector<1x16x16xf32> to vector<16x16xf32>
    %cst_37 = arith.constant dense<0.000000e+00> : vector<16x16xf32>
    %57 = tpu.matmul %54, %56, %cst_37 {dimension_numbers = #tpu.dot_dimension_numbers<[1], [0], [0], [1], [0, 0, 1, 1], [], []>} : vector<16x16xf32>, vector<16x16xf32>, vector<16x16xf32> -> vector<16x16xf32>
    %58 = arith.addf %53, %57 : vector<16x16xf32>
    %59 = vector.extract_strided_slice %52 {offsets = [1, 0], sizes = [16, 16], strides = [1, 1]} : vector<24x16xf32> to vector<16x16xf32>
    %c1_38 = arith.constant 1 : index
    %c0_39 = arith.constant 0 : index
    %c0_40 = arith.constant 0 : index
    %60 = vector.load %arg4[%c1_38, %c0_39, %c0_40] : memref<9x16x16xf32, #tpu.memory_space<vmem>>, vector<1x16x16xf32>
    %61 = vector.shape_cast %60 : vector<1x16x16xf32> to vector<16x16xf32>
    %cst_41 = arith.constant dense<0.000000e+00> : vector<16x16xf32>
    %62 = tpu.matmul %59, %61, %cst_41 {dimension_numbers = #tpu.dot_dimension_numbers<[1], [0], [0], [1], [0, 0, 1, 1], [], []>} : vector<16x16xf32>, vector<16x16xf32>, vector<16x16xf32> -> vector<16x16xf32>
    %63 = arith.addf %58, %62 : vector<16x16xf32>
    %64 = vector.extract_strided_slice %52 {offsets = [2, 0], sizes = [16, 16], strides = [1, 1]} : vector<24x16xf32> to vector<16x16xf32>
    %c2_42 = arith.constant 2 : index
    %c0_43 = arith.constant 0 : index
    %c0_44 = arith.constant 0 : index
    %65 = vector.load %arg4[%c2_42, %c0_43, %c0_44] : memref<9x16x16xf32, #tpu.memory_space<vmem>>, vector<1x16x16xf32>
    %66 = vector.shape_cast %65 : vector<1x16x16xf32> to vector<16x16xf32>
    %cst_45 = arith.constant dense<0.000000e+00> : vector<16x16xf32>
    %67 = tpu.matmul %64, %66, %cst_45 {dimension_numbers = #tpu.dot_dimension_numbers<[1], [0], [0], [1], [0, 0, 1, 1], [], []>} : vector<16x16xf32>, vector<16x16xf32>, vector<16x16xf32> -> vector<16x16xf32>
    %68 = arith.addf %63, %67 : vector<16x16xf32>
    %69 = vector.extract_strided_slice %52 {offsets = [3, 0], sizes = [16, 16], strides = [1, 1]} : vector<24x16xf32> to vector<16x16xf32>
    %c3_46 = arith.constant 3 : index
    %c0_47 = arith.constant 0 : index
    %c0_48 = arith.constant 0 : index
    %70 = vector.load %arg4[%c3_46, %c0_47, %c0_48] : memref<9x16x16xf32, #tpu.memory_space<vmem>>, vector<1x16x16xf32>
    %71 = vector.shape_cast %70 : vector<1x16x16xf32> to vector<16x16xf32>
    %cst_49 = arith.constant dense<0.000000e+00> : vector<16x16xf32>
    %72 = tpu.matmul %69, %71, %cst_49 {dimension_numbers = #tpu.dot_dimension_numbers<[1], [0], [0], [1], [0, 0, 1, 1], [], []>} : vector<16x16xf32>, vector<16x16xf32>, vector<16x16xf32> -> vector<16x16xf32>
    %73 = arith.addf %68, %72 : vector<16x16xf32>
    %74 = vector.extract_strided_slice %52 {offsets = [4, 0], sizes = [16, 16], strides = [1, 1]} : vector<24x16xf32> to vector<16x16xf32>
    %c4_50 = arith.constant 4 : index
    %c0_51 = arith.constant 0 : index
    %c0_52 = arith.constant 0 : index
    %75 = vector.load %arg4[%c4_50, %c0_51, %c0_52] : memref<9x16x16xf32, #tpu.memory_space<vmem>>, vector<1x16x16xf32>
    %76 = vector.shape_cast %75 : vector<1x16x16xf32> to vector<16x16xf32>
    %cst_53 = arith.constant dense<0.000000e+00> : vector<16x16xf32>
    %77 = tpu.matmul %74, %76, %cst_53 {dimension_numbers = #tpu.dot_dimension_numbers<[1], [0], [0], [1], [0, 0, 1, 1], [], []>} : vector<16x16xf32>, vector<16x16xf32>, vector<16x16xf32> -> vector<16x16xf32>
    %78 = arith.addf %73, %77 : vector<16x16xf32>
    %79 = vector.extract_strided_slice %52 {offsets = [5, 0], sizes = [16, 16], strides = [1, 1]} : vector<24x16xf32> to vector<16x16xf32>
    %c5_54 = arith.constant 5 : index
    %c0_55 = arith.constant 0 : index
    %c0_56 = arith.constant 0 : index
    %80 = vector.load %arg4[%c5_54, %c0_55, %c0_56] : memref<9x16x16xf32, #tpu.memory_space<vmem>>, vector<1x16x16xf32>
    %81 = vector.shape_cast %80 : vector<1x16x16xf32> to vector<16x16xf32>
    %cst_57 = arith.constant dense<0.000000e+00> : vector<16x16xf32>
    %82 = tpu.matmul %79, %81, %cst_57 {dimension_numbers = #tpu.dot_dimension_numbers<[1], [0], [0], [1], [0, 0, 1, 1], [], []>} : vector<16x16xf32>, vector<16x16xf32>, vector<16x16xf32> -> vector<16x16xf32>
    %83 = arith.addf %78, %82 : vector<16x16xf32>
    %84 = vector.extract_strided_slice %52 {offsets = [6, 0], sizes = [16, 16], strides = [1, 1]} : vector<24x16xf32> to vector<16x16xf32>
    %c6_58 = arith.constant 6 : index
    %c0_59 = arith.constant 0 : index
    %c0_60 = arith.constant 0 : index
    %85 = vector.load %arg4[%c6_58, %c0_59, %c0_60] : memref<9x16x16xf32, #tpu.memory_space<vmem>>, vector<1x16x16xf32>
    %86 = vector.shape_cast %85 : vector<1x16x16xf32> to vector<16x16xf32>
    %cst_61 = arith.constant dense<0.000000e+00> : vector<16x16xf32>
    %87 = tpu.matmul %84, %86, %cst_61 {dimension_numbers = #tpu.dot_dimension_numbers<[1], [0], [0], [1], [0, 0, 1, 1], [], []>} : vector<16x16xf32>, vector<16x16xf32>, vector<16x16xf32> -> vector<16x16xf32>
    %88 = arith.addf %83, %87 : vector<16x16xf32>
    %89 = vector.extract_strided_slice %52 {offsets = [7, 0], sizes = [16, 16], strides = [1, 1]} : vector<24x16xf32> to vector<16x16xf32>
    %c7_62 = arith.constant 7 : index
    %c0_63 = arith.constant 0 : index
    %c0_64 = arith.constant 0 : index
    %90 = vector.load %arg4[%c7_62, %c0_63, %c0_64] : memref<9x16x16xf32, #tpu.memory_space<vmem>>, vector<1x16x16xf32>
    %91 = vector.shape_cast %90 : vector<1x16x16xf32> to vector<16x16xf32>
    %cst_65 = arith.constant dense<0.000000e+00> : vector<16x16xf32>
    %92 = tpu.matmul %89, %91, %cst_65 {dimension_numbers = #tpu.dot_dimension_numbers<[1], [0], [0], [1], [0, 0, 1, 1], [], []>} : vector<16x16xf32>, vector<16x16xf32>, vector<16x16xf32> -> vector<16x16xf32>
    %93 = arith.addf %88, %92 : vector<16x16xf32>
    %94 = vector.extract_strided_slice %52 {offsets = [8, 0], sizes = [16, 16], strides = [1, 1]} : vector<24x16xf32> to vector<16x16xf32>
    %c8_66 = arith.constant 8 : index
    %c0_67 = arith.constant 0 : index
    %c0_68 = arith.constant 0 : index
    %95 = vector.load %arg4[%c8_66, %c0_67, %c0_68] : memref<9x16x16xf32, #tpu.memory_space<vmem>>, vector<1x16x16xf32>
    %96 = vector.shape_cast %95 : vector<1x16x16xf32> to vector<16x16xf32>
    %cst_69 = arith.constant dense<0.000000e+00> : vector<16x16xf32>
    %97 = tpu.matmul %94, %96, %cst_69 {dimension_numbers = #tpu.dot_dimension_numbers<[1], [0], [0], [1], [0, 0, 1, 1], [], []>} : vector<16x16xf32>, vector<16x16xf32>, vector<16x16xf32> -> vector<16x16xf32>
    %98 = arith.addf %93, %97 : vector<16x16xf32>
    %c0_70 = arith.constant 0 : index
    %c0_71 = arith.constant 0 : index
    %99 = vector.load %arg5[%c0_70, %c0_71] : memref<1x16xf32, #tpu.memory_space<vmem>>, vector<1x16xf32>
    %100 = vector.broadcast %99 : vector<1x16xf32> to vector<16x16xf32>
    %101 = arith.addf %98, %100 : vector<16x16xf32>
    %cst_72 = arith.constant 0.000000e+00 : f32
    %102 = vector.broadcast %cst_72 : f32 to vector<16x16xf32>
    %103 = arith.maximumf %101, %102 : vector<16x16xf32>
    %cst_73 = arith.constant 0.000000e+00 : f32
    %104 = vector.broadcast %cst_73 : f32 to vector<6x16xf32>
    %105 = vector.extract_strided_slice %103 {offsets = [0, 0], sizes = [6, 16], strides = [1, 1]} : vector<16x16xf32> to vector<6x16xf32>
    %c0_74 = arith.constant 0 : index
    %c0_75 = arith.constant 0 : index
    %c0_76 = arith.constant 0 : index
    %106 = vector.load %arg6[%c0_74, %c0_75, %c0_76] : memref<11x16x16xf32, #tpu.memory_space<vmem>>, vector<1x16x16xf32>
    %107 = vector.shape_cast %106 : vector<1x16x16xf32> to vector<16x16xf32>
    %cst_77 = arith.constant dense<0.000000e+00> : vector<6x16xf32>
    %108 = tpu.matmul %105, %107, %cst_77 {dimension_numbers = #tpu.dot_dimension_numbers<[1], [0], [0], [1], [0, 0, 1, 1], [], []>} : vector<6x16xf32>, vector<16x16xf32>, vector<6x16xf32> -> vector<6x16xf32>
    %109 = arith.addf %104, %108 : vector<6x16xf32>
    %110 = vector.extract_strided_slice %103 {offsets = [1, 0], sizes = [6, 16], strides = [1, 1]} : vector<16x16xf32> to vector<6x16xf32>
    %c1_78 = arith.constant 1 : index
    %c0_79 = arith.constant 0 : index
    %c0_80 = arith.constant 0 : index
    %111 = vector.load %arg6[%c1_78, %c0_79, %c0_80] : memref<11x16x16xf32, #tpu.memory_space<vmem>>, vector<1x16x16xf32>
    %112 = vector.shape_cast %111 : vector<1x16x16xf32> to vector<16x16xf32>
    %cst_81 = arith.constant dense<0.000000e+00> : vector<6x16xf32>
    %113 = tpu.matmul %110, %112, %cst_81 {dimension_numbers = #tpu.dot_dimension_numbers<[1], [0], [0], [1], [0, 0, 1, 1], [], []>} : vector<6x16xf32>, vector<16x16xf32>, vector<6x16xf32> -> vector<6x16xf32>
    %114 = arith.addf %109, %113 : vector<6x16xf32>
    %115 = vector.extract_strided_slice %103 {offsets = [2, 0], sizes = [6, 16], strides = [1, 1]} : vector<16x16xf32> to vector<6x16xf32>
    %c2_82 = arith.constant 2 : index
    %c0_83 = arith.constant 0 : index
    %c0_84 = arith.constant 0 : index
    %116 = vector.load %arg6[%c2_82, %c0_83, %c0_84] : memref<11x16x16xf32, #tpu.memory_space<vmem>>, vector<1x16x16xf32>
    %117 = vector.shape_cast %116 : vector<1x16x16xf32> to vector<16x16xf32>
    %cst_85 = arith.constant dense<0.000000e+00> : vector<6x16xf32>
    %118 = tpu.matmul %115, %117, %cst_85 {dimension_numbers = #tpu.dot_dimension_numbers<[1], [0], [0], [1], [0, 0, 1, 1], [], []>} : vector<6x16xf32>, vector<16x16xf32>, vector<6x16xf32> -> vector<6x16xf32>
    %119 = arith.addf %114, %118 : vector<6x16xf32>
    %120 = vector.extract_strided_slice %103 {offsets = [3, 0], sizes = [6, 16], strides = [1, 1]} : vector<16x16xf32> to vector<6x16xf32>
    %c3_86 = arith.constant 3 : index
    %c0_87 = arith.constant 0 : index
    %c0_88 = arith.constant 0 : index
    %121 = vector.load %arg6[%c3_86, %c0_87, %c0_88] : memref<11x16x16xf32, #tpu.memory_space<vmem>>, vector<1x16x16xf32>
    %122 = vector.shape_cast %121 : vector<1x16x16xf32> to vector<16x16xf32>
    %cst_89 = arith.constant dense<0.000000e+00> : vector<6x16xf32>
    %123 = tpu.matmul %120, %122, %cst_89 {dimension_numbers = #tpu.dot_dimension_numbers<[1], [0], [0], [1], [0, 0, 1, 1], [], []>} : vector<6x16xf32>, vector<16x16xf32>, vector<6x16xf32> -> vector<6x16xf32>
    %124 = arith.addf %119, %123 : vector<6x16xf32>
    %125 = vector.extract_strided_slice %103 {offsets = [4, 0], sizes = [6, 16], strides = [1, 1]} : vector<16x16xf32> to vector<6x16xf32>
    %c4_90 = arith.constant 4 : index
    %c0_91 = arith.constant 0 : index
    %c0_92 = arith.constant 0 : index
    %126 = vector.load %arg6[%c4_90, %c0_91, %c0_92] : memref<11x16x16xf32, #tpu.memory_space<vmem>>, vector<1x16x16xf32>
    %127 = vector.shape_cast %126 : vector<1x16x16xf32> to vector<16x16xf32>
    %cst_93 = arith.constant dense<0.000000e+00> : vector<6x16xf32>
    %128 = tpu.matmul %125, %127, %cst_93 {dimension_numbers = #tpu.dot_dimension_numbers<[1], [0], [0], [1], [0, 0, 1, 1], [], []>} : vector<6x16xf32>, vector<16x16xf32>, vector<6x16xf32> -> vector<6x16xf32>
    %129 = arith.addf %124, %128 : vector<6x16xf32>
    %130 = vector.extract_strided_slice %103 {offsets = [5, 0], sizes = [6, 16], strides = [1, 1]} : vector<16x16xf32> to vector<6x16xf32>
    %c5_94 = arith.constant 5 : index
    %c0_95 = arith.constant 0 : index
    %c0_96 = arith.constant 0 : index
    %131 = vector.load %arg6[%c5_94, %c0_95, %c0_96] : memref<11x16x16xf32, #tpu.memory_space<vmem>>, vector<1x16x16xf32>
    %132 = vector.shape_cast %131 : vector<1x16x16xf32> to vector<16x16xf32>
    %cst_97 = arith.constant dense<0.000000e+00> : vector<6x16xf32>
    %133 = tpu.matmul %130, %132, %cst_97 {dimension_numbers = #tpu.dot_dimension_numbers<[1], [0], [0], [1], [0, 0, 1, 1], [], []>} : vector<6x16xf32>, vector<16x16xf32>, vector<6x16xf32> -> vector<6x16xf32>
    %134 = arith.addf %129, %133 : vector<6x16xf32>
    %135 = vector.extract_strided_slice %103 {offsets = [6, 0], sizes = [6, 16], strides = [1, 1]} : vector<16x16xf32> to vector<6x16xf32>
    %c6_98 = arith.constant 6 : index
    %c0_99 = arith.constant 0 : index
    %c0_100 = arith.constant 0 : index
    %136 = vector.load %arg6[%c6_98, %c0_99, %c0_100] : memref<11x16x16xf32, #tpu.memory_space<vmem>>, vector<1x16x16xf32>
    %137 = vector.shape_cast %136 : vector<1x16x16xf32> to vector<16x16xf32>
    %cst_101 = arith.constant dense<0.000000e+00> : vector<6x16xf32>
    %138 = tpu.matmul %135, %137, %cst_101 {dimension_numbers = #tpu.dot_dimension_numbers<[1], [0], [0], [1], [0, 0, 1, 1], [], []>} : vector<6x16xf32>, vector<16x16xf32>, vector<6x16xf32> -> vector<6x16xf32>
    %139 = arith.addf %134, %138 : vector<6x16xf32>
    %140 = vector.extract_strided_slice %103 {offsets = [7, 0], sizes = [6, 16], strides = [1, 1]} : vector<16x16xf32> to vector<6x16xf32>
    %c7_102 = arith.constant 7 : index
    %c0_103 = arith.constant 0 : index
    %c0_104 = arith.constant 0 : index
    %141 = vector.load %arg6[%c7_102, %c0_103, %c0_104] : memref<11x16x16xf32, #tpu.memory_space<vmem>>, vector<1x16x16xf32>
    %142 = vector.shape_cast %141 : vector<1x16x16xf32> to vector<16x16xf32>
    %cst_105 = arith.constant dense<0.000000e+00> : vector<6x16xf32>
    %143 = tpu.matmul %140, %142, %cst_105 {dimension_numbers = #tpu.dot_dimension_numbers<[1], [0], [0], [1], [0, 0, 1, 1], [], []>} : vector<6x16xf32>, vector<16x16xf32>, vector<6x16xf32> -> vector<6x16xf32>
    %144 = arith.addf %139, %143 : vector<6x16xf32>
    %145 = vector.extract_strided_slice %103 {offsets = [8, 0], sizes = [6, 16], strides = [1, 1]} : vector<16x16xf32> to vector<6x16xf32>
    %c8_106 = arith.constant 8 : index
    %c0_107 = arith.constant 0 : index
    %c0_108 = arith.constant 0 : index
    %146 = vector.load %arg6[%c8_106, %c0_107, %c0_108] : memref<11x16x16xf32, #tpu.memory_space<vmem>>, vector<1x16x16xf32>
    %147 = vector.shape_cast %146 : vector<1x16x16xf32> to vector<16x16xf32>
    %cst_109 = arith.constant dense<0.000000e+00> : vector<6x16xf32>
    %148 = tpu.matmul %145, %147, %cst_109 {dimension_numbers = #tpu.dot_dimension_numbers<[1], [0], [0], [1], [0, 0, 1, 1], [], []>} : vector<6x16xf32>, vector<16x16xf32>, vector<6x16xf32> -> vector<6x16xf32>
    %149 = arith.addf %144, %148 : vector<6x16xf32>
    %150 = vector.extract_strided_slice %103 {offsets = [9, 0], sizes = [6, 16], strides = [1, 1]} : vector<16x16xf32> to vector<6x16xf32>
    %c9 = arith.constant 9 : index
    %c0_110 = arith.constant 0 : index
    %c0_111 = arith.constant 0 : index
    %151 = vector.load %arg6[%c9, %c0_110, %c0_111] : memref<11x16x16xf32, #tpu.memory_space<vmem>>, vector<1x16x16xf32>
    %152 = vector.shape_cast %151 : vector<1x16x16xf32> to vector<16x16xf32>
    %cst_112 = arith.constant dense<0.000000e+00> : vector<6x16xf32>
    %153 = tpu.matmul %150, %152, %cst_112 {dimension_numbers = #tpu.dot_dimension_numbers<[1], [0], [0], [1], [0, 0, 1, 1], [], []>} : vector<6x16xf32>, vector<16x16xf32>, vector<6x16xf32> -> vector<6x16xf32>
    %154 = arith.addf %149, %153 : vector<6x16xf32>
    %155 = vector.extract_strided_slice %103 {offsets = [10, 0], sizes = [6, 16], strides = [1, 1]} : vector<16x16xf32> to vector<6x16xf32>
    %c10 = arith.constant 10 : index
    %c0_113 = arith.constant 0 : index
    %c0_114 = arith.constant 0 : index
    %156 = vector.load %arg6[%c10, %c0_113, %c0_114] : memref<11x16x16xf32, #tpu.memory_space<vmem>>, vector<1x16x16xf32>
    %157 = vector.shape_cast %156 : vector<1x16x16xf32> to vector<16x16xf32>
    %cst_115 = arith.constant dense<0.000000e+00> : vector<6x16xf32>
    %158 = tpu.matmul %155, %157, %cst_115 {dimension_numbers = #tpu.dot_dimension_numbers<[1], [0], [0], [1], [0, 0, 1, 1], [], []>} : vector<6x16xf32>, vector<16x16xf32>, vector<6x16xf32> -> vector<6x16xf32>
    %159 = arith.addf %154, %158 : vector<6x16xf32>
    %c0_116 = arith.constant 0 : index
    %c0_117 = arith.constant 0 : index
    %160 = vector.load %arg7[%c0_116, %c0_117] : memref<1x16xf32, #tpu.memory_space<vmem>>, vector<1x16xf32>
    %161 = vector.broadcast %160 : vector<1x16xf32> to vector<6x16xf32>
    %162 = arith.addf %159, %161 : vector<6x16xf32>
    %cst_118 = arith.constant 0.000000e+00 : f32
    %163 = vector.broadcast %cst_118 : f32 to vector<6x16xf32>
    %164 = arith.maximumf %162, %163 : vector<6x16xf32>
    %c0_119 = arith.constant 0 : index
    %c0_120 = arith.constant 0 : index
    %165 = vector.load %arg9[%c0_119, %c0_120] : memref<1x440xf32, #tpu.memory_space<vmem>>, vector<1x440xf32>
    %166 = vector.extract_strided_slice %164 {offsets = [0, 0], sizes = [1, 16], strides = [1, 1]} : vector<6x16xf32> to vector<1x16xf32>
    %c0_121 = arith.constant 0 : index
    %c0_122 = arith.constant 0 : index
    %c0_123 = arith.constant 0 : index
    %167 = vector.load %arg8[%c0_121, %c0_122, %c0_123] : memref<6x16x440xf32, #tpu.memory_space<vmem>>, vector<1x16x440xf32>
    %168 = vector.shape_cast %167 : vector<1x16x440xf32> to vector<16x440xf32>
    %cst_124 = arith.constant dense<0.000000e+00> : vector<1x440xf32>
    %169 = tpu.matmul %166, %168, %cst_124 {dimension_numbers = #tpu.dot_dimension_numbers<[1], [0], [0], [1], [0, 0, 1, 1], [], []>} : vector<1x16xf32>, vector<16x440xf32>, vector<1x440xf32> -> vector<1x440xf32>
    %170 = arith.addf %165, %169 : vector<1x440xf32>
    %171 = vector.extract_strided_slice %164 {offsets = [1, 0], sizes = [1, 16], strides = [1, 1]} : vector<6x16xf32> to vector<1x16xf32>
    %c1_125 = arith.constant 1 : index
    %c0_126 = arith.constant 0 : index
    %c0_127 = arith.constant 0 : index
    %172 = vector.load %arg8[%c1_125, %c0_126, %c0_127] : memref<6x16x440xf32, #tpu.memory_space<vmem>>, vector<1x16x440xf32>
    %173 = vector.shape_cast %172 : vector<1x16x440xf32> to vector<16x440xf32>
    %cst_128 = arith.constant dense<0.000000e+00> : vector<1x440xf32>
    %174 = tpu.matmul %171, %173, %cst_128 {dimension_numbers = #tpu.dot_dimension_numbers<[1], [0], [0], [1], [0, 0, 1, 1], [], []>} : vector<1x16xf32>, vector<16x440xf32>, vector<1x440xf32> -> vector<1x440xf32>
    %175 = arith.addf %170, %174 : vector<1x440xf32>
    %176 = vector.extract_strided_slice %164 {offsets = [2, 0], sizes = [1, 16], strides = [1, 1]} : vector<6x16xf32> to vector<1x16xf32>
    %c2_129 = arith.constant 2 : index
    %c0_130 = arith.constant 0 : index
    %c0_131 = arith.constant 0 : index
    %177 = vector.load %arg8[%c2_129, %c0_130, %c0_131] : memref<6x16x440xf32, #tpu.memory_space<vmem>>, vector<1x16x440xf32>
    %178 = vector.shape_cast %177 : vector<1x16x440xf32> to vector<16x440xf32>
    %cst_132 = arith.constant dense<0.000000e+00> : vector<1x440xf32>
    %179 = tpu.matmul %176, %178, %cst_132 {dimension_numbers = #tpu.dot_dimension_numbers<[1], [0], [0], [1], [0, 0, 1, 1], [], []>} : vector<1x16xf32>, vector<16x440xf32>, vector<1x440xf32> -> vector<1x440xf32>
    %180 = arith.addf %175, %179 : vector<1x440xf32>
    %181 = vector.extract_strided_slice %164 {offsets = [3, 0], sizes = [1, 16], strides = [1, 1]} : vector<6x16xf32> to vector<1x16xf32>
    %c3_133 = arith.constant 3 : index
    %c0_134 = arith.constant 0 : index
    %c0_135 = arith.constant 0 : index
    %182 = vector.load %arg8[%c3_133, %c0_134, %c0_135] : memref<6x16x440xf32, #tpu.memory_space<vmem>>, vector<1x16x440xf32>
    %183 = vector.shape_cast %182 : vector<1x16x440xf32> to vector<16x440xf32>
    %cst_136 = arith.constant dense<0.000000e+00> : vector<1x440xf32>
    %184 = tpu.matmul %181, %183, %cst_136 {dimension_numbers = #tpu.dot_dimension_numbers<[1], [0], [0], [1], [0, 0, 1, 1], [], []>} : vector<1x16xf32>, vector<16x440xf32>, vector<1x440xf32> -> vector<1x440xf32>
    %185 = arith.addf %180, %184 : vector<1x440xf32>
    %186 = vector.extract_strided_slice %164 {offsets = [4, 0], sizes = [1, 16], strides = [1, 1]} : vector<6x16xf32> to vector<1x16xf32>
    %c4_137 = arith.constant 4 : index
    %c0_138 = arith.constant 0 : index
    %c0_139 = arith.constant 0 : index
    %187 = vector.load %arg8[%c4_137, %c0_138, %c0_139] : memref<6x16x440xf32, #tpu.memory_space<vmem>>, vector<1x16x440xf32>
    %188 = vector.shape_cast %187 : vector<1x16x440xf32> to vector<16x440xf32>
    %cst_140 = arith.constant dense<0.000000e+00> : vector<1x440xf32>
    %189 = tpu.matmul %186, %188, %cst_140 {dimension_numbers = #tpu.dot_dimension_numbers<[1], [0], [0], [1], [0, 0, 1, 1], [], []>} : vector<1x16xf32>, vector<16x440xf32>, vector<1x440xf32> -> vector<1x440xf32>
    %190 = arith.addf %185, %189 : vector<1x440xf32>
    %191 = vector.extract_strided_slice %164 {offsets = [5, 0], sizes = [1, 16], strides = [1, 1]} : vector<6x16xf32> to vector<1x16xf32>
    %c5_141 = arith.constant 5 : index
    %c0_142 = arith.constant 0 : index
    %c0_143 = arith.constant 0 : index
    %192 = vector.load %arg8[%c5_141, %c0_142, %c0_143] : memref<6x16x440xf32, #tpu.memory_space<vmem>>, vector<1x16x440xf32>
    %193 = vector.shape_cast %192 : vector<1x16x440xf32> to vector<16x440xf32>
    %cst_144 = arith.constant dense<0.000000e+00> : vector<1x440xf32>
    %194 = tpu.matmul %191, %193, %cst_144 {dimension_numbers = #tpu.dot_dimension_numbers<[1], [0], [0], [1], [0, 0, 1, 1], [], []>} : vector<1x16xf32>, vector<16x440xf32>, vector<1x440xf32> -> vector<1x440xf32>
    %195 = arith.addf %190, %194 : vector<1x440xf32>
    %cst_145 = arith.constant 0.000000e+00 : f32
    %196 = vector.broadcast %cst_145 : f32 to vector<1x440xf32>
    %197 = arith.maximumf %195, %196 : vector<1x440xf32>
    %c0_146 = arith.constant 0 : index
    %c0_147 = arith.constant 0 : index
    %198 = vector.load %arg10[%c0_146, %c0_147] : memref<440x32xf32, #tpu.memory_space<vmem>>, vector<440x32xf32>
    %cst_148 = arith.constant dense<0.000000e+00> : vector<1x32xf32>
    %199 = tpu.matmul %197, %198, %cst_148 {dimension_numbers = #tpu.dot_dimension_numbers<[1], [0], [0], [1], [0, 0, 1, 1], [], []>} : vector<1x440xf32>, vector<440x32xf32>, vector<1x32xf32> -> vector<1x32xf32>
    %c0_149 = arith.constant 0 : index
    %c0_150 = arith.constant 0 : index
    %200 = vector.load %arg11[%c0_149, %c0_150] : memref<1x32xf32, #tpu.memory_space<vmem>>, vector<1x32xf32>
    %201 = arith.addf %199, %200 : vector<1x32xf32>
    %c0_151 = arith.constant 0 : index
    %c0_152 = arith.constant 0 : index
    %c0_153 = arith.constant 0 : index
    %202 = vector.load %arg12[%c0_151, %c0_152, %c0_153] : memref<1x1x32xf32, #tpu.memory_space<vmem>>, vector<1x1x32xf32>
    %203 = vector.shape_cast %202 : vector<1x1x32xf32> to vector<1x32xf32>
    %204 = vector.shape_cast %201 : vector<1x32xf32> to vector<1x1x32xf32>
    tpu.vector_store %arg12[%c0_151, %c0_152, %c0_153], %204 {strides = array<i32>} : memref<1x1x32xf32, #tpu.memory_space<vmem>>, vector<1x1x32xf32>,
    return
  }
  func.func @transform_0(%arg0: i32) -> (i32, i32, i32) {
    %c0_i32 = arith.constant 0 : i32
    %c0_i32_0 = arith.constant 0 : i32
    %c0_i32_1 = arith.constant 0 : i32
    return %arg0, %c0_i32, %c0_i32_0 : i32, i32, i32
  }
  func.func @transform_1(%arg0: i32) -> (i32, i32, i32) {
    %c0_i32 = arith.constant 0 : i32
    %c0_i32_0 = arith.constant 0 : i32
    %c0_i32_1 = arith.constant 0 : i32
    %c0_i32_2 = arith.constant 0 : i32
    return %c0_i32, %c0_i32_0, %c0_i32_1 : i32, i32, i32
  }
  func.func @transform_2(%arg0: i32) -> (i32, i32) {
    %c0_i32 = arith.constant 0 : i32
    %c0_i32_0 = arith.constant 0 : i32
    %c0_i32_1 = arith.constant 0 : i32
    return %c0_i32, %c0_i32_0 : i32, i32
  }
  func.func @transform_3(%arg0: i32) -> (i32, i32, i32) {
    %c0_i32 = arith.constant 0 : i32
    %c0_i32_0 = arith.constant 0 : i32
    %c0_i32_1 = arith.constant 0 : i32
    %c0_i32_2 = arith.constant 0 : i32
    return %c0_i32, %c0_i32_0, %c0_i32_1 : i32, i32, i32
  }
  func.func @transform_4(%arg0: i32) -> (i32, i32) {
    %c0_i32 = arith.constant 0 : i32
    %c0_i32_0 = arith.constant 0 : i32
    %c0_i32_1 = arith.constant 0 : i32
    return %c0_i32, %c0_i32_0 : i32, i32
  }
  func.func @transform_5(%arg0: i32) -> (i32, i32, i32) {
    %c0_i32 = arith.constant 0 : i32
    %c0_i32_0 = arith.constant 0 : i32
    %c0_i32_1 = arith.constant 0 : i32
    %c0_i32_2 = arith.constant 0 : i32
    return %c0_i32, %c0_i32_0, %c0_i32_1 : i32, i32, i32
  }
  func.func @transform_6(%arg0: i32) -> (i32, i32) {
    %c0_i32 = arith.constant 0 : i32
    %c0_i32_0 = arith.constant 0 : i32
    %c0_i32_1 = arith.constant 0 : i32
    return %c0_i32, %c0_i32_0 : i32, i32
  }
  func.func @transform_7(%arg0: i32) -> (i32, i32, i32) {
    %c0_i32 = arith.constant 0 : i32
    %c0_i32_0 = arith.constant 0 : i32
    %c0_i32_1 = arith.constant 0 : i32
    %c0_i32_2 = arith.constant 0 : i32
    return %c0_i32, %c0_i32_0, %c0_i32_1 : i32, i32, i32
  }
  func.func @transform_8(%arg0: i32) -> (i32, i32) {
    %c0_i32 = arith.constant 0 : i32
    %c0_i32_0 = arith.constant 0 : i32
    %c0_i32_1 = arith.constant 0 : i32
    return %c0_i32, %c0_i32_0 : i32, i32
  }
  func.func @transform_9(%arg0: i32) -> (i32, i32) {
    %c0_i32 = arith.constant 0 : i32
    %c0_i32_0 = arith.constant 0 : i32
    %c0_i32_1 = arith.constant 0 : i32
    return %c0_i32, %c0_i32_0 : i32, i32
  }
  func.func @transform_10(%arg0: i32) -> (i32, i32) {
    %c0_i32 = arith.constant 0 : i32
    %c0_i32_0 = arith.constant 0 : i32
    %c0_i32_1 = arith.constant 0 : i32
    return %c0_i32, %c0_i32_0 : i32, i32
  }
  func.func @transform_11(%arg0: i32) -> (i32, i32, i32) {
    %c0_i32 = arith.constant 0 : i32
    %c0_i32_0 = arith.constant 0 : i32
    %c0_i32_1 = arith.constant 0 : i32
    return %arg0, %c0_i32, %c0_i32_0 : i32, i32, i32
  }
}

</mosaic_0001>

<llo_original>
// kernel: cnn_encoder_forward.1
$region0: #{cnn_encoder_forward.1}
  #allocation0 [shape = 'u32[]', space=smem, size = 0x4, offset = 0x4, fixed_abs, tag = 'smem constant byte address 0x4 - core index']
  #allocation1 [shape = 'u32[72,128]{1,0:T(1,128)}', space=vmem, size = 0x9000, scoped, tag = 'internal scratch']
  %s0 = inlined_call_operand.vmem [shape: f32[2,32,8], index: 0, kind: input, shape index: {}]
  %s1 = inlined_call_operand.vmem [shape: f32[9,8,16], index: 1, kind: input, shape index: {}]
  %s2 = inlined_call_operand.vmem [shape: f32[1,16], index: 2, kind: input, shape index: {}]
  %s3 = inlined_call_operand.hbm [shape: f32[9,16,16], index: 3, kind: input, shape index: {}]
  %s4 = inlined_call_operand.vmem [shape: f32[1,16], index: 4, kind: input, shape index: {}]
  %s5 = inlined_call_operand.vmem [shape: f32[11,16,16], index: 5, kind: input, shape index: {}]
  %s6 = inlined_call_operand.vmem [shape: f32[1,16], index: 6, kind: input, shape index: {}]
  %s7 = inlined_call_operand.vmem [shape: f32[6,16,440], index: 7, kind: input, shape index: {}]
  %s8 = inlined_call_operand.vmem [shape: f32[1,440], index: 8, kind: input, shape index: {}]
  %s9 = inlined_call_operand.vmem [shape: f32[440,32], index: 9, kind: input, shape index: {}]
  %s10 = inlined_call_operand.vmem [shape: f32[1,32], index: 10, kind: input, shape index: {}]
  %s11 = inlined_call_operand.vmem [shape: f32[2,1,32], index: 11, kind: output, shape index: {}]
  %s12 = sld [smem:[#allocation0]]
  $region81: #{cnn_encoder_forward.1} parent=0
    _
  %s14 = ssub.s32 1, %s12
  %s15 = scalar_select 0, %s14, %s12
  $region1: #{cnn_encoder_forward.1} parent=0
    #allocation2 [shape = 'u8[73728]{0}', space=vmem, size = 0x12000, scoped, tag = 'input window, operand 3, single buffered']
    #allocation3 [shape = 's32[2]{0}', space=sflag, size = 0x8, scoped, tag = 'scoped memory for cnn_encoder_forward.1']
    %16 = vsyncpa [#allocation3], 0
    loop: start=0, step=1, limit=4
    $region2: #{cnn_encoder_forward.1} parent=1 // loop_pre_header
      _
    $region3: #{cnn_encoder_forward.1} parent=1 // loop_header
      %s18 = sphi 0, %s22
      %p19 = scmp.ge.s32.totalorder %s18, 4
      %s28 = sphi 0, %s30
      %s31 = sphi 0, %s28
      %s32 = sphi 0, %s31
      %s48 = sphi 0, %s32
      %s52 = sphi 0, %s52
      %s54 = sphi 0, %s52
      %s55 = sphi 0, %s54
      %s69 = sphi 0, %s55
      %s73 = sphi 0, %s73
      %s75 = sphi 0, %s73
      %s76 = sphi 0, %s75
      %s90 = sphi 0, %s76
      %s94 = sphi 0, %s94
      %s96 = sphi 0, %s94
      %s97 = sphi 0, %s96
      %s111 = sphi 0, %s97
      %s115 = sphi 0, %s115
      %s117 = sphi 0, %s115
      %s118 = sphi 0, %s117
      %s132 = sphi 0, %s118
      %s136 = sphi 0, %s136
      %s138 = sphi 0, %s136
      %s139 = sphi 0, %s138
      %s153 = sphi 0, %s139
      %s157 = sphi 0, %s157
      %s159 = sphi 0, %s157
      %s160 = sphi 0, %s159
      %s174 = sphi 0, %s160
      %s178 = sphi 0, %s178
      %s180 = sphi 0, %s178
      %s181 = sphi 0, %s180
      %s195 = sphi 0, %s181
      %s199 = sphi 0, %s199
      %s201 = sphi 0, %s199
      %s202 = sphi 0, %s201
      %s216 = sphi 0, %s202
      %s220 = sphi 0, %s220
      %s222 = sphi 0, %s220
      %s223 = sphi 0, %s222
      %s237 = sphi 0, %s223
      %s241 = sphi 0, %s241
      %s243 = sphi 0, %s241
      %s244 = sphi 0, %s243
      %s258 = sphi 0, %s244
      %s264 = sphi 0, %s266
      %s267 = sphi 0, %s264
      %s268 = sphi 0, %s267
      %s284 = sphi 0, %s268
    $region4: #{cnn_encoder_forward.1} parent=1 // loop_header_branch
      %21 = sbr.rel (%p19) target = $region8
    $region5: #{cnn_encoder_forward.1} parent=1 // loop_body
      %s23 = ssub.s32 %s18, 1
      %s24 = ssub.s32 %s18, 2
      %s25 = sadd.s32 %s18, 1
      %s26 = ssub.s32 %s18, %s25
      %p27 = scmp.eq.s32.totalorder %s26, 0
      %s29 = sadd.s32 %s28, 1
      %s30 = scalar_select %p27, %s28, %s29
      %p33 = pneg %p27
      %p34 = scmp.eq.s32.totalorder %s18, 1
      %p35 = por %p33, %p34
      %p36 = scmp.ne.s32.totalorder %s28, %s31
      %p37 = scmp.eq.s32.totalorder %s18, 0
      %p38 = por %p36, %p37
      %p39 = scmp.ne.s32.totalorder %s28, %s31
      %p40 = scmp.eq.s32.totalorder %s23, 1
      %p41 = por %p39, %p40
      %p42 = scmp.ne.s32.totalorder %s31, %s32
      %p43 = scmp.eq.s32.totalorder %s23, 0
      %p44 = por %p42, %p43
      %p45 = scmp.ne.s32.totalorder %s31, %s32
      %p46 = scmp.eq.s32.totalorder %s24, 1
      %p47 = por %p45, %p46
      %p49 = scmp.ne.s32.totalorder %s32, %s48
      %p50 = scmp.eq.s32.totalorder %s24, 0
      %p51 = por %p49, %p50
      %s53 = sadd.s32 %s52, 1
      %p56 = scmp.eq.s32.totalorder %s18, 1
      %p57 = scmp.ne.s32.totalorder %s52, %s54
      %p58 = scmp.eq.s32.totalorder %s18, 0
      %p59 = por %p57, %p58
      %p60 = scmp.ne.s32.totalorder %s52, %s54
      %p61 = scmp.eq.s32.totalorder %s23, 1
      %p62 = por %p60, %p61
      %p63 = scmp.ne.s32.totalorder %s54, %s55
      %p64 = scmp.eq.s32.totalorder %s23, 0
      %p65 = por %p63, %p64
      %p66 = scmp.ne.s32.totalorder %s54, %s55
      %p67 = scmp.eq.s32.totalorder %s24, 1
      %p68 = por %p66, %p67
      %p70 = scmp.ne.s32.totalorder %s55, %s69
      %p71 = scmp.eq.s32.totalorder %s24, 0
      %p72 = por %p70, %p71
      %s74 = sadd.s32 %s73, 1
      %p77 = scmp.eq.s32.totalorder %s18, 1
      %p78 = scmp.ne.s32.totalorder %s73, %s75
      %p79 = scmp.eq.s32.totalorder %s18, 0
      %p80 = por %p78, %p79
      %p81 = scmp.ne.s32.totalorder %s73, %s75
      %p82 = scmp.eq.s32.totalorder %s23, 1
      %p83 = por %p81, %p82
      %p84 = scmp.ne.s32.totalorder %s75, %s76
      %p85 = scmp.eq.s32.totalorder %s23, 0
      %p86 = por %p84, %p85
      %p87 = scmp.ne.s32.totalorder %s75, %s76
      %p88 = scmp.eq.s32.totalorder %s24, 1
      %p89 = por %p87, %p88
      %p91 = scmp.ne.s32.totalorder %s76, %s90
      %p92 = scmp.eq.s32.totalorder %s24, 0
      %p93 = por %p91, %p92
      %s95 = sadd.s32 %s94, 1
      %p98 = scmp.eq.s32.totalorder %s18, 1
      %p99 = scmp.ne.s32.totalorder %s94, %s96
      %p100 = scmp.eq.s32.totalorder %s18, 0
      %p101 = por %p99, %p100
      %p102 = scmp.ne.s32.totalorder %s94, %s96
      %p103 = scmp.eq.s32.totalorder %s23, 1
      %p104 = por %p102, %p103
      %p105 = scmp.ne.s32.totalorder %s96, %s97
      %p106 = scmp.eq.s32.totalorder %s23, 0
      %p107 = por %p105, %p106
      %p108 = scmp.ne.s32.totalorder %s96, %s97
      %p109 = scmp.eq.s32.totalorder %s24, 1
      %p110 = por %p108, %p109
      %p112 = scmp.ne.s32.totalorder %s97, %s111
      %p113 = scmp.eq.s32.totalorder %s24, 0
      %p114 = por %p112, %p113
      %s116 = sadd.s32 %s115, 1
      %p119 = scmp.eq.s32.totalorder %s18, 1
      %p120 = scmp.ne.s32.totalorder %s115, %s117
      %p121 = scmp.eq.s32.totalorder %s18, 0
      %p122 = por %p120, %p121
      %p123 = scmp.ne.s32.totalorder %s115, %s117
      %p124 = scmp.eq.s32.totalorder %s23, 1
      %p125 = por %p123, %p124
      %p126 = scmp.ne.s32.totalorder %s117, %s118
      %p127 = scmp.eq.s32.totalorder %s23, 0
      %p128 = por %p126, %p127
      %p129 = scmp.ne.s32.totalorder %s117, %s118
      %p130 = scmp.eq.s32.totalorder %s24, 1
      %p131 = por %p129, %p130
      %p133 = scmp.ne.s32.totalorder %s118, %s132
      %p134 = scmp.eq.s32.totalorder %s24, 0
      %p135 = por %p133, %p134
      %s137 = sadd.s32 %s136, 1
      %p140 = scmp.eq.s32.totalorder %s18, 1
      %p141 = scmp.ne.s32.totalorder %s136, %s138
      %p142 = scmp.eq.s32.totalorder %s18, 0
      %p143 = por %p141, %p142
      %p144 = scmp.ne.s32.totalorder %s136, %s138
      %p145 = scmp.eq.s32.totalorder %s23, 1
      %p146 = por %p144, %p145
      %p147 = scmp.ne.s32.totalorder %s138, %s139
      %p148 = scmp.eq.s32.totalorder %s23, 0
      %p149 = por %p147, %p148
      %p150 = scmp.ne.s32.totalorder %s138, %s139
      %p151 = scmp.eq.s32.totalorder %s24, 1
      %p152 = por %p150, %p151
      %p154 = scmp.ne.s32.totalorder %s139, %s153
      %p155 = scmp.eq.s32.totalorder %s24, 0
      %p156 = por %p154, %p155
      %s158 = sadd.s32 %s157, 1
      %p161 = scmp.eq.s32.totalorder %s18, 1
      %p162 = scmp.ne.s32.totalorder %s157, %s159
      %p163 = scmp.eq.s32.totalorder %s18, 0
      %p164 = por %p162, %p163
      %p165 = scmp.ne.s32.totalorder %s157, %s159
      %p166 = scmp.eq.s32.totalorder %s23, 1
      %p167 = por %p165, %p166
      %p168 = scmp.ne.s32.totalorder %s159, %s160
      %p169 = scmp.eq.s32.totalorder %s23, 0
      %p170 = por %p168, %p169
      %p171 = scmp.ne.s32.totalorder %s159, %s160
      %p172 = scmp.eq.s32.totalorder %s24, 1
      %p173 = por %p171, %p172
      %p175 = scmp.ne.s32.totalorder %s160, %s174
      %p176 = scmp.eq.s32.totalorder %s24, 0
      %p177 = por %p175, %p176
      %s179 = sadd.s32 %s178, 1
      %p182 = scmp.eq.s32.totalorder %s18, 1
      %p183 = scmp.ne.s32.totalorder %s178, %s180
      %p184 = scmp.eq.s32.totalorder %s18, 0
      %p185 = por %p183, %p184
      %p186 = scmp.ne.s32.totalorder %s178, %s180
      %p187 = scmp.eq.s32.totalorder %s23, 1
      %p188 = por %p186, %p187
      %p189 = scmp.ne.s32.totalorder %s180, %s181
      %p190 = scmp.eq.s32.totalorder %s23, 0
      %p191 = por %p189, %p190
      %p192 = scmp.ne.s32.totalorder %s180, %s181
      %p193 = scmp.eq.s32.totalorder %s24, 1
      %p194 = por %p192, %p193
      %p196 = scmp.ne.s32.totalorder %s181, %s195
      %p197 = scmp.eq.s32.totalorder %s24, 0
      %p198 = por %p196, %p197
      %s200 = sadd.s32 %s199, 1
      %p203 = scmp.eq.s32.totalorder %s18, 1
      %p204 = scmp.ne.s32.totalorder %s199, %s201
      %p205 = scmp.eq.s32.totalorder %s18, 0
      %p206 = por %p204, %p205
      %p207 = scmp.ne.s32.totalorder %s199, %s201
      %p208 = scmp.eq.s32.totalorder %s23, 1
      %p209 = por %p207, %p208
      %p210 = scmp.ne.s32.totalorder %s201, %s202
      %p211 = scmp.eq.s32.totalorder %s23, 0
      %p212 = por %p210, %p211
      %p213 = scmp.ne.s32.totalorder %s201, %s202
      %p214 = scmp.eq.s32.totalorder %s24, 1
      %p215 = por %p213, %p214
      %p217 = scmp.ne.s32.totalorder %s202, %s216
      %p218 = scmp.eq.s32.totalorder %s24, 0
      %p219 = por %p217, %p218
      %s221 = sadd.s32 %s220, 1
      %p224 = scmp.eq.s32.totalorder %s18, 1
      %p225 = scmp.ne.s32.totalorder %s220, %s222
      %p226 = scmp.eq.s32.totalorder %s18, 0
      %p227 = por %p225, %p226
      %p228 = scmp.ne.s32.totalorder %s220, %s222
      %p229 = scmp.eq.s32.totalorder %s23, 1
      %p230 = por %p228, %p229
      %p231 = scmp.ne.s32.totalorder %s222, %s223
      %p232 = scmp.eq.s32.totalorder %s23, 0
      %p233 = por %p231, %p232
      %p234 = scmp.ne.s32.totalorder %s222, %s223
      %p235 = scmp.eq.s32.totalorder %s24, 1
      %p236 = por %p234, %p235
      %p238 = scmp.ne.s32.totalorder %s223, %s237
      %p239 = scmp.eq.s32.totalorder %s24, 0
      %p240 = por %p238, %p239
      %s242 = sadd.s32 %s241, 1
      %p245 = scmp.eq.s32.totalorder %s18, 1
      %p246 = scmp.ne.s32.totalorder %s241, %s243
      %p247 = scmp.eq.s32.totalorder %s18, 0
      %p248 = por %p246, %p247
      %p249 = scmp.ne.s32.totalorder %s241, %s243
      %p250 = scmp.eq.s32.totalorder %s23, 1
      %p251 = por %p249, %p250
      %p252 = scmp.ne.s32.totalorder %s243, %s244
      %p253 = scmp.eq.s32.totalorder %s23, 0
      %p254 = por %p252, %p253
      %p255 = scmp.ne.s32.totalorder %s243, %s244
      %p256 = scmp.eq.s32.totalorder %s24, 1
      %p257 = por %p255, %p256
      %p259 = scmp.ne.s32.totalorder %s244, %s258
      %p260 = scmp.eq.s32.totalorder %s24, 0
      %p261 = por %p259, %p260
      %s262 = ssub.s32 %s18, %s25
      %p263 = scmp.eq.s32.totalorder %s262, 0
      %s265 = sadd.s32 %s264, 1
      %s266 = scalar_select %p263, %s264, %s265
      %p269 = pneg %p263
      %p270 = scmp.eq.s32.totalorder %s18, 1
      %p271 = por %p269, %p270
      %p272 = scmp.ne.s32.totalorder %s264, %s267
      %p273 = scmp.eq.s32.totalorder %s18, 0
      %p274 = por %p272, %p273
      %p275 = scmp.ne.s32.totalorder %s264, %s267
      %p276 = scmp.eq.s32.totalorder %s23, 1
      %p277 = por %p275, %p276
      %p278 = scmp.ne.s32.totalorder %s267, %s268
      %p279 = scmp.eq.s32.totalorder %s23, 0
      %p280 = por %p278, %p279
      %p281 = scmp.ne.s32.totalorder %s267, %s268
      %p282 = scmp.eq.s32.totalorder %s24, 1
      %p283 = por %p281, %p282
      %p285 = scmp.ne.s32.totalorder %s268, %s284
      %p286 = scmp.eq.s32.totalorder %s24, 0
      %p287 = por %p285, %p286
      %p288 = scmp.le.s32.totalorder 1, %s18
      %p289 = scmp.lt.s32.totalorder %s18, 3
      %p290 = pnand %p288, %p289
      %p291 = pneg %p290
      // Predicated region
      $region9: #{cnn_encoder_forward.1} parent=5 // pred_check
        _
      $region10: #{cnn_encoder_forward.1} parent=5 // pred_check_branch
        %293 = sbr.rel (%p290) target = $region12
      $region11: #{cnn_encoder_forward.1} parent=5 // pred_region
        %s294 = ssub.s32 %s18, 1
        // Predicated region
        $region13: #{cnn_encoder_forward.1} parent=11 // pred_check
          %p295 = pneg %p65
        $region14: #{cnn_encoder_forward.1} parent=11 // pred_check_branch
          %297 = sbr.rel (%p295) target = $region16
        $region15: #{cnn_encoder_forward.1} parent=11 // pred_region
          _
        $region16: #{cnn_encoder_forward.1} parent=11 // pred_fallthru
          _
        // Predicated region
        $region17: #{cnn_encoder_forward.1} parent=11 // pred_check
          %p298 = pneg %p86
        $region18: #{cnn_encoder_forward.1} parent=11 // pred_check_branch
          %300 = sbr.rel (%p298) target = $region20
        $region19: #{cnn_encoder_forward.1} parent=11 // pred_region
          _
        $region20: #{cnn_encoder_forward.1} parent=11 // pred_fallthru
          _
        // Predicated region
        $region21: #{cnn_encoder_forward.1} parent=11 // pred_check
          %p301 = pneg %p107
        $region22: #{cnn_encoder_forward.1} parent=11 // pred_check_branch
          %303 = sbr.rel (%p301) target = $region24
        $region23: #{cnn_encoder_forward.1} parent=11 // pred_region
          %305 = vsyncadd [#allocation3], 0
          %s306 = sshll.u32 %s3, 4
          %s307 = int_to_ptr.hbm [resolvable:$true] %s306
          %s308 = sshll.u32 [#allocation2], 4
          %s309 = int_to_ptr.vmem [resolvable:$true] %s308
          %314 = dma.hbm_to_vmem [thread:$0]  %s307, 2304, %s309, [#allocation3], 128, 128, 8
        $region24: #{cnn_encoder_forward.1} parent=11 // pred_fallthru
          _
        // Predicated region
        $region25: #{cnn_encoder_forward.1} parent=11 // pred_check
          %p315 = pneg %p128
        $region26: #{cnn_encoder_forward.1} parent=11 // pred_check_branch
          %317 = sbr.rel (%p315) target = $region28
        $region27: #{cnn_encoder_forward.1} parent=11 // pred_region
          _
        $region28: #{cnn_encoder_forward.1} parent=11 // pred_fallthru
          _
        // Predicated region
        $region29: #{cnn_encoder_forward.1} parent=11 // pred_check
          %p318 = pneg %p149
        $region30: #{cnn_encoder_forward.1} parent=11 // pred_check_branch
          %320 = sbr.rel (%p318) target = $region32
        $region31: #{cnn_encoder_forward.1} parent=11 // pred_region
          _
        $region32: #{cnn_encoder_forward.1} parent=11 // pred_fallthru
          _
        // Predicated region
        $region33: #{cnn_encoder_forward.1} parent=11 // pred_check
          %p321 = pneg %p170
        $region34: #{cnn_encoder_forward.1} parent=11 // pred_check_branch
          %323 = sbr.rel (%p321) target = $region36
        $region35: #{cnn_encoder_forward.1} parent=11 // pred_region
          _
        $region36: #{cnn_encoder_forward.1} parent=11 // pred_fallthru
          _
        // Predicated region
        $region37: #{cnn_encoder_forward.1} parent=11 // pred_check
          %p324 = pneg %p191
        $region38: #{cnn_encoder_forward.1} parent=11 // pred_check_branch
          %326 = sbr.rel (%p324) target = $region40
        $region39: #{cnn_encoder_forward.1} parent=11 // pred_region
          _
        $region40: #{cnn_encoder_forward.1} parent=11 // pred_fallthru
          _
        // Predicated region
        $region41: #{cnn_encoder_forward.1} parent=11 // pred_check
          %p327 = pneg %p212
        $region42: #{cnn_encoder_forward.1} parent=11 // pred_check_branch
          %329 = sbr.rel (%p327) target = $region44
        $region43: #{cnn_encoder_forward.1} parent=11 // pred_region
          _
        $region44: #{cnn_encoder_forward.1} parent=11 // pred_fallthru
          _
        // Predicated region
        $region45: #{cnn_encoder_forward.1} parent=11 // pred_check
          %p330 = pneg %p233
        $region46: #{cnn_encoder_forward.1} parent=11 // pred_check_branch
          %332 = sbr.rel (%p330) target = $region48
        $region47: #{cnn_encoder_forward.1} parent=11 // pred_region
          _
        $region48: #{cnn_encoder_forward.1} parent=11 // pred_fallthru
          _
        // Predicated region
        $region49: #{cnn_encoder_forward.1} parent=11 // pred_check
          %p333 = pneg %p254
        $region50: #{cnn_encoder_forward.1} parent=11 // pred_check_branch
          %335 = sbr.rel (%p333) target = $region52
        $region51: #{cnn_encoder_forward.1} parent=11 // pred_region
          _
        $region52: #{cnn_encoder_forward.1} parent=11 // pred_fallthru
          _
      $region12: #{cnn_encoder_forward.1} parent=5 // pred_fallthru
        _
      %p336 = scmp.lt.s32.totalorder %s18, 2
      // Predicated region
      $region53: #{cnn_encoder_forward.1} parent=5 // pred_check
        %p337 = pneg %p336
      $region54: #{cnn_encoder_forward.1} parent=5 // pred_check_branch
        %339 = sbr.rel (%p337) target = $region56
      $region55: #{cnn_encoder_forward.1} parent=5 // pred_region
        // Predicated region
        $region57: #{cnn_encoder_forward.1} parent=55 // pred_check
          %p340 = pneg %p38
        $region58: #{cnn_encoder_forward.1} parent=55 // pred_check_branch
          %342 = sbr.rel (%p340) target = $region60
        $region59: #{cnn_encoder_forward.1} parent=55 // pred_region
          %p343 = scmp.lt.s32.totalorder %s18, 1
          %s344 = scalar_select %p343, %s18, 1
          %s345 = smul.addr %s344, 4
          %s346 = smul.addr %s345, 8
          %s347 = scalar_lea.vmem %s0, %s346
        $region60: #{cnn_encoder_forward.1} parent=55 // pred_fallthru
          _
      $region56: #{cnn_encoder_forward.1} parent=5 // pred_fallthru
        _
      %p348 = scmp.le.s32.totalorder 1, %s18
      %p349 = scmp.lt.s32.totalorder %s18, 3
      %p350 = pnand %p348, %p349
      %p351 = pneg %p350
      // Predicated region
      $region61: #{cnn_encoder_forward.1} parent=5 // pred_check
        _
      $region62: #{cnn_encoder_forward.1} parent=5 // pred_check_branch
        %353 = sbr.rel (%p350) target = $region64
      $region63: #{cnn_encoder_forward.1} parent=5 // pred_region
        %s354 = ssub.s32 %s18, 1
        // Predicated region
        $region65: #{cnn_encoder_forward.1} parent=63 // pred_check
          %p355 = pneg %p107
        $region66: #{cnn_encoder_forward.1} parent=63 // pred_check_branch
          %357 = sbr.rel (%p355) target = $region68
        $region67: #{cnn_encoder_forward.1} parent=63 // pred_region
          %359 = dma.done [#allocation3], 2304
        $region68: #{cnn_encoder_forward.1} parent=63 // pred_fallthru
          _
        %p360 = scmp.lt.s32.totalorder %s23, 1
        %s361 = scalar_select %p360, %s23, 1
        %s362 = smul.addr %s361, 4
        %s363 = smul.addr %s362, 8
        %s364 = scalar_lea.vmem %s0, %s363
        %p365 = pneg %p44
        %p366 = pneg %p41
        %p367 = pneg %p65
        %p368 = pneg %p62
        %p369 = pneg %p86
        %p370 = pneg %p83
        %p371 = pneg %p107
        %p372 = pneg %p104
        %p373 = pneg %p128
        %p374 = pneg %p125
        %p375 = pneg %p149
        %p376 = pneg %p146
        %p377 = pneg %p170
        %p378 = pneg %p167
        %p379 = pneg %p191
        %p380 = pneg %p188
        %p381 = pneg %p212
        %p382 = pneg %p209
        %p383 = pneg %p233
        %p384 = pneg %p230
        %p385 = pneg %p254
        %p386 = pneg %p251
        %p387 = pneg %p280
        %p388 = pneg %p277
        %p389 = scmp.lt.s32.totalorder %s23, 1
        %s390 = scalar_select %p389, %s23, 1
        %s391 = scalar_lea.vmem %s11, %s390
        %p392 = scmp.lt.s32.totalorder %s23, 1
        %s393 = scalar_select %p392, %s23, 1
        %s394 = smul.addr %s393, 4
        %s395 = smul.addr %s394, 8
        %s396 = scalar_lea.vmem %s0, %s395
        %p397 = scmp.lt.s32.totalorder %s23, 1
        %s398 = scalar_select %p397, %s23, 1
        %s399 = scalar_lea.vmem %s11, %s398
        %v400 = vld [vmem:[%s396] sm:$0xff]
        %v401 = vld [vmem:[%s396 + $0x8] sm:$0xff]
        %v402 = vld [vmem:[%s396 + $0x10] sm:$0xff]
        %v403 = vld [vmem:[%s396 + $0x18] sm:$0xff]
        %v404 = vld [vmem:[%s1] sm:$0xff]
        %s405 = scalar_lea.vmem %s1, 8
        %v406 = vld [vmem:[%s405] sm:$0xff]
        %vm411 = vcmask 1046528
        %v412 = vrot.slane %v400, 1
        %v413 = vrot.slane %v401, 1
        %v414 = vsel %vm411, %v412, %v413
        %v415 = vrot.slane %v402, 1
        %v416 = vsel %vm411, %v413, %v415
        %v417 = vrot.slane %v403, 1
        %v418 = vsel %vm411, %v415, %v417
        %vm419 = vcmask 64512
        %v420 = vsel %vm419, %v414, 0
        %v422 = vsel %vm419, %v416, 0
        %v424 = vsel %vm419, %v418, 0
        %426 = vmatpush.msra.mxu0 0.0
        %427 = vmatpush.msra.mxu0 0.0
        %428 = vmatpush.msra.mxu0 0.0
        %429 = vmatpush.msra.mxu0 0.0
        %430 = vmatpush.msra.mxu0 0.0
        %431 = vmatpush.msra.mxu0 0.0
        %432 = vmatpush.msra.mxu0 0.0
        %433 = vmatpush.msra.mxu0 0.0
        %434 = vmatpush.msra.mxu0 0.0
        %435 = vmatpush.msra.mxu0 0.0
        %436 = vmatpush.msra.mxu0 0.0
        %437 = vmatpush.msra.mxu0 0.0
        %438 = vmatpush.msra.mxu0 0.0
        %439 = vmatpush.msra.mxu0 0.0
        %440 = vmatpush.msra.mxu0 0.0
        %441 = vmatpush.msra.mxu0 %v406
        %442 = vmatmul.f32.gmra.mxu0 %v420
        %v443 = vpop.f32.mrf.mxu0
        %v444 = vadd.f32 0.0, %v443
        %445 = vmatmul.f32.gmra.mxu0 %v422
        %v446 = vpop.f32.mrf.mxu0
        %v447 = vadd.f32 0.0, %v446
        %448 = vmatmul.f32.gmra.mxu0 %v424
        %v449 = vpop.f32.mrf.mxu0
        %v450 = vadd.f32 0.0, %v449
        %451 = vdwg.mxu0
        %v452 = vsel %vm419, %v400, 0
        %v454 = vsel %vm419, %v401, 0
        %v456 = vsel %vm419, %v402, 0
        %458 = vmatpush.msra.mxu0 0.0
        %459 = vmatpush.msra.mxu0 0.0
        %460 = vmatpush.msra.mxu0 0.0
        %461 = vmatpush.msra.mxu0 0.0
        %462 = vmatpush.msra.mxu0 0.0
        %463 = vmatpush.msra.mxu0 0.0
        %464 = vmatpush.msra.mxu0 0.0
        %465 = vmatpush.msra.mxu0 0.0
        %466 = vmatpush.msra.mxu0 0.0
        %467 = vmatpush.msra.mxu0 0.0
        %468 = vmatpush.msra.mxu0 0.0
        %469 = vmatpush.msra.mxu0 0.0
        %470 = vmatpush.msra.mxu0 0.0
        %471 = vmatpush.msra.mxu0 0.0
        %472 = vmatpush.msra.mxu0 0.0
        %473 = vmatpush.msra.mxu0 %v404
        %474 = vmatmul.f32.gmra.mxu0 %v452
        %v475 = vpop.f32.mrf.mxu0
        %v476 = vadd.f32 %v444, %v475
        %477 = vmatmul.f32.gmra.mxu0 %v454
        %v478 = vpop.f32.mrf.mxu0
        %v479 = vadd.f32 %v447, %v478
        %480 = vmatmul.f32.gmra.mxu0 %v456
        %v481 = vpop.f32.mrf.mxu0
        %v482 = vadd.f32 %v450, %v481
        %483 = vdwg.mxu0
        %s484 = scalar_lea.vmem %s1, 16
        %v485 = vld [vmem:[%s484] sm:$0xff]
        %vm486 = vcmask 1045504
        %v487 = vrot.slane %v400, 2
        %v488 = vrot.slane %v401, 2
        %v489 = vsel %vm486, %v487, %v488
        %v490 = vrot.slane %v402, 2
        %v491 = vsel %vm486, %v488, %v490
        %v492 = vrot.slane %v403, 2
        %v493 = vsel %vm486, %v490, %v492
        %v494 = vsel %vm419, %v489, 0
        %v496 = vsel %vm419, %v491, 0
        %v498 = vsel %vm419, %v493, 0
        %500 = vmatpush.msra.mxu0 0.0
        %501 = vmatpush.msra.mxu0 0.0
        %502 = vmatpush.msra.mxu0 0.0
        %503 = vmatpush.msra.mxu0 0.0
        %504 = vmatpush.msra.mxu0 0.0
        %505 = vmatpush.msra.mxu0 0.0
        %506 = vmatpush.msra.mxu0 0.0
        %507 = vmatpush.msra.mxu0 0.0
        %508 = vmatpush.msra.mxu0 0.0
        %509 = vmatpush.msra.mxu0 0.0
        %510 = vmatpush.msra.mxu0 0.0
        %511 = vmatpush.msra.mxu0 0.0
        %512 = vmatpush.msra.mxu0 0.0
        %513 = vmatpush.msra.mxu0 0.0
        %514 = vmatpush.msra.mxu0 0.0
        %515 = vmatpush.msra.mxu0 %v485
        %516 = vmatmul.f32.gmra.mxu0 %v494
        %v517 = vpop.f32.mrf.mxu0
        %v518 = vadd.f32 0.0, %v517
        %519 = vmatmul.f32.gmra.mxu0 %v496
        %v520 = vpop.f32.mrf.mxu0
        %v521 = vadd.f32 0.0, %v520
        %522 = vmatmul.f32.gmra.mxu0 %v498
        %v523 = vpop.f32.mrf.mxu0
        %v524 = vadd.f32 0.0, %v523
        %525 = vdwg.mxu0
        %v526 = vadd.f32 %v476, %v518
        %v527 = vadd.f32 %v479, %v521
        %v528 = vadd.f32 %v482, %v524
        %s529 = scalar_lea.vmem %s1, 24
        %v530 = vld [vmem:[%s529] sm:$0xff]
        %vm531 = vcmask 1044480
        %v532 = vrot.slane %v400, 3
        %v533 = vrot.slane %v401, 3
        %v534 = vsel %vm531, %v532, %v533
        %v535 = vrot.slane %v402, 3
        %v536 = vsel %vm531, %v533, %v535
        %v537 = vrot.slane %v403, 3
        %v538 = vsel %vm531, %v535, %v537
        %v539 = vsel %vm419, %v534, 0
        %v541 = vsel %vm419, %v536, 0
        %v543 = vsel %vm419, %v538, 0
        %545 = vmatpush.msra.mxu0 0.0
        %546 = vmatpush.msra.mxu0 0.0
        %547 = vmatpush.msra.mxu0 0.0
        %548 = vmatpush.msra.mxu0 0.0
        %549 = vmatpush.msra.mxu0 0.0
        %550 = vmatpush.msra.mxu0 0.0
        %551 = vmatpush.msra.mxu0 0.0
        %552 = vmatpush.msra.mxu0 0.0
        %553 = vmatpush.msra.mxu0 0.0
        %554 = vmatpush.msra.mxu0 0.0
        %555 = vmatpush.msra.mxu0 0.0
        %556 = vmatpush.msra.mxu0 0.0
        %557 = vmatpush.msra.mxu0 0.0
        %558 = vmatpush.msra.mxu0 0.0
        %559 = vmatpush.msra.mxu0 0.0
        %560 = vmatpush.msra.mxu0 %v530
        %561 = vmatmul.f32.gmra.mxu0 %v539
        %v562 = vpop.f32.mrf.mxu0
        %v563 = vadd.f32 0.0, %v562
        %564 = vmatmul.f32.gmra.mxu0 %v541
        %v565 = vpop.f32.mrf.mxu0
        %v566 = vadd.f32 0.0, %v565
        %567 = vmatmul.f32.gmra.mxu0 %v543
        %v568 = vpop.f32.mrf.mxu0
        %v569 = vadd.f32 0.0, %v568
        %570 = vdwg.mxu0
        %v571 = vadd.f32 %v526, %v563
        %v572 = vadd.f32 %v527, %v566
        %v573 = vadd.f32 %v528, %v569
        %s574 = scalar_lea.vmem %s1, 32
        %v575 = vld [vmem:[%s574] sm:$0xff]
        %vm576 = vcmask 1043456
        %v577 = vrot.slane %v400, 4
        %v578 = vrot.slane %v401, 4
        %v579 = vsel %vm576, %v577, %v578
        %v580 = vrot.slane %v402, 4
        %v581 = vsel %vm576, %v578, %v580
        %v582 = vrot.slane %v403, 4
        %v583 = vsel %vm576, %v580, %v582
        %v584 = vsel %vm419, %v579, 0
        %v586 = vsel %vm419, %v581, 0
        %v588 = vsel %vm419, %v583, 0
        %590 = vmatpush.msra.mxu0 0.0
        %591 = vmatpush.msra.mxu0 0.0
        %592 = vmatpush.msra.mxu0 0.0
        %593 = vmatpush.msra.mxu0 0.0
        %594 = vmatpush.msra.mxu0 0.0
        %595 = vmatpush.msra.mxu0 0.0
        %596 = vmatpush.msra.mxu0 0.0
        %597 = vmatpush.msra.mxu0 0.0
        %598 = vmatpush.msra.mxu0 0.0
        %599 = vmatpush.msra.mxu0 0.0
        %600 = vmatpush.msra.mxu0 0.0
        %601 = vmatpush.msra.mxu0 0.0
        %602 = vmatpush.msra.mxu0 0.0
        %603 = vmatpush.msra.mxu0 0.0
        %604 = vmatpush.msra.mxu0 0.0
        %605 = vmatpush.msra.mxu0 %v575
        %606 = vmatmul.f32.gmra.mxu0 %v584
        %v607 = vpop.f32.mrf.mxu0
        %v608 = vadd.f32 0.0, %v607
        %609 = vmatmul.f32.gmra.mxu0 %v586
        %v610 = vpop.f32.mrf.mxu0
        %v611 = vadd.f32 0.0, %v610
        %612 = vmatmul.f32.gmra.mxu0 %v588
        %v613 = vpop.f32.mrf.mxu0
        %v614 = vadd.f32 0.0, %v613
        %615 = vdwg.mxu0
        %v616 = vadd.f32 %v571, %v608
        %v617 = vadd.f32 %v572, %v611
        %v618 = vadd.f32 %v573, %v614
        %s619 = scalar_lea.vmem %s1, 40
        %v620 = vld [vmem:[%s619] sm:$0xff]
        %vm621 = vcmask 1042432
        %v622 = vrot.slane %v400, 5
        %v623 = vrot.slane %v401, 5
        %v624 = vsel %vm621, %v622, %v623
        %v625 = vrot.slane %v402, 5
        %v626 = vsel %vm621, %v623, %v625
        %v627 = vrot.slane %v403, 5
        %v628 = vsel %vm621, %v625, %v627
        %v629 = vsel %vm419, %v624, 0
        %v631 = vsel %vm419, %v626, 0
        %v633 = vsel %vm419, %v628, 0
        %635 = vmatpush.msra.mxu0 0.0
        %636 = vmatpush.msra.mxu0 0.0
        %637 = vmatpush.msra.mxu0 0.0
        %638 = vmatpush.msra.mxu0 0.0
        %639 = vmatpush.msra.mxu0 0.0
        %640 = vmatpush.msra.mxu0 0.0
        %641 = vmatpush.msra.mxu0 0.0
        %642 = vmatpush.msra.mxu0 0.0
        %643 = vmatpush.msra.mxu0 0.0
        %644 = vmatpush.msra.mxu0 0.0
        %645 = vmatpush.msra.mxu0 0.0
        %646 = vmatpush.msra.mxu0 0.0
        %647 = vmatpush.msra.mxu0 0.0
        %648 = vmatpush.msra.mxu0 0.0
        %649 = vmatpush.msra.mxu0 0.0
        %650 = vmatpush.msra.mxu0 %v620
        %651 = vmatmul.f32.gmra.mxu0 %v629
        %v652 = vpop.f32.mrf.mxu0
        %v653 = vadd.f32 0.0, %v652
        %654 = vmatmul.f32.gmra.mxu0 %v631
        %v655 = vpop.f32.mrf.mxu0
        %v656 = vadd.f32 0.0, %v655
        %657 = vmatmul.f32.gmra.mxu0 %v633
        %v658 = vpop.f32.mrf.mxu0
        %v659 = vadd.f32 0.0, %v658
        %660 = vdwg.mxu0
        %v661 = vadd.f32 %v616, %v653
        %v662 = vadd.f32 %v617, %v656
        %v663 = vadd.f32 %v618, %v659
        %s664 = scalar_lea.vmem %s1, 48
        %v665 = vld [vmem:[%s664] sm:$0xff]
        %vm666 = vcmask 1041408
        %v667 = vrot.slane %v400, 6
        %v668 = vrot.slane %v401, 6
        %v669 = vsel %vm666, %v667, %v668
        %v670 = vrot.slane %v402, 6
        %v671 = vsel %vm666, %v668, %v670
        %v672 = vrot.slane %v403, 6
        %v673 = vsel %vm666, %v670, %v672
        %v674 = vsel %vm419, %v669, 0
        %v676 = vsel %vm419, %v671, 0
        %v678 = vsel %vm419, %v673, 0
        %680 = vmatpush.msra.mxu0 0.0
        %681 = vmatpush.msra.mxu0 0.0
        %682 = vmatpush.msra.mxu0 0.0
        %683 = vmatpush.msra.mxu0 0.0
        %684 = vmatpush.msra.mxu0 0.0
        %685 = vmatpush.msra.mxu0 0.0
        %686 = vmatpush.msra.mxu0 0.0
        %687 = vmatpush.msra.mxu0 0.0
        %688 = vmatpush.msra.mxu0 0.0
        %689 = vmatpush.msra.mxu0 0.0
        %690 = vmatpush.msra.mxu0 0.0
        %691 = vmatpush.msra.mxu0 0.0
        %692 = vmatpush.msra.mxu0 0.0
        %693 = vmatpush.msra.mxu0 0.0
        %694 = vmatpush.msra.mxu0 0.0
        %695 = vmatpush.msra.mxu0 %v665
        %696 = vmatmul.f32.gmra.mxu0 %v674
        %v697 = vpop.f32.mrf.mxu0
        %v698 = vadd.f32 0.0, %v697
        %699 = vmatmul.f32.gmra.mxu0 %v676
        %v700 = vpop.f32.mrf.mxu0
        %v701 = vadd.f32 0.0, %v700
        %702 = vmatmul.f32.gmra.mxu0 %v678
        %v703 = vpop.f32.mrf.mxu0
        %v704 = vadd.f32 0.0, %v703
        %705 = vdwg.mxu0
        %v706 = vadd.f32 %v661, %v698
        %v707 = vadd.f32 %v662, %v701
        %v708 = vadd.f32 %v663, %v704
        %s709 = scalar_lea.vmem %s1, 56
        %v710 = vld [vmem:[%s709] sm:$0xff]
        %vm711 = vcmask 1040384
        %v712 = vrot.slane %v400, 7
        %v713 = vrot.slane %v401, 7
        %v714 = vsel %vm711, %v712, %v713
        %v715 = vrot.slane %v402, 7
        %v716 = vsel %vm711, %v713, %v715
        %v717 = vrot.slane %v403, 7
        %v718 = vsel %vm711, %v715, %v717
        %v719 = vsel %vm419, %v714, 0
        %v721 = vsel %vm419, %v716, 0
        %v723 = vsel %vm419, %v718, 0
        %725 = vmatpush.msra.mxu0 0.0
        %726 = vmatpush.msra.mxu0 0.0
        %727 = vmatpush.msra.mxu0 0.0
        %728 = vmatpush.msra.mxu0 0.0
        %729 = vmatpush.msra.mxu0 0.0
        %730 = vmatpush.msra.mxu0 0.0
        %731 = vmatpush.msra.mxu0 0.0
        %732 = vmatpush.msra.mxu0 0.0
        %733 = vmatpush.msra.mxu0 0.0
        %734 = vmatpush.msra.mxu0 0.0
        %735 = vmatpush.msra.mxu0 0.0
        %736 = vmatpush.msra.mxu0 0.0
        %737 = vmatpush.msra.mxu0 0.0
        %738 = vmatpush.msra.mxu0 0.0
        %739 = vmatpush.msra.mxu0 0.0
        %740 = vmatpush.msra.mxu0 %v710
        %741 = vmatmul.f32.gmra.mxu0 %v719
        %v742 = vpop.f32.mrf.mxu0
        %v743 = vadd.f32 0.0, %v742
        %744 = vmatmul.f32.gmra.mxu0 %v721
        %v745 = vpop.f32.mrf.mxu0
        %v746 = vadd.f32 0.0, %v745
        %747 = vmatmul.f32.gmra.mxu0 %v723
        %v748 = vpop.f32.mrf.mxu0
        %v749 = vadd.f32 0.0, %v748
        %750 = vdwg.mxu0
        %v751 = vadd.f32 %v706, %v743
        %v752 = vadd.f32 %v707, %v746
        %v753 = vadd.f32 %v708, %v749
        %s754 = scalar_lea.vmem %s1, 64
        %v755 = vld [vmem:[%s754] sm:$0xff]
        %v756 = vsel %vm419, %v403, 0
        %758 = vmatpush.msra.mxu0 0.0
        %759 = vmatpush.msra.mxu0 0.0
        %760 = vmatpush.msra.mxu0 0.0
        %761 = vmatpush.msra.mxu0 0.0
        %762 = vmatpush.msra.mxu0 0.0
        %763 = vmatpush.msra.mxu0 0.0
        %764 = vmatpush.msra.mxu0 0.0
        %765 = vmatpush.msra.mxu0 0.0
        %766 = vmatpush.msra.mxu0 0.0
        %767 = vmatpush.msra.mxu0 0.0
        %768 = vmatpush.msra.mxu0 0.0
        %769 = vmatpush.msra.mxu0 0.0
        %770 = vmatpush.msra.mxu0 0.0
        %771 = vmatpush.msra.mxu0 0.0
        %772 = vmatpush.msra.mxu0 0.0
        %773 = vmatpush.msra.mxu0 %v755
        %774 = vmatmul.f32.gmra.mxu0 %v454
        %v775 = vpop.f32.mrf.mxu0
        %v776 = vadd.f32 0.0, %v775
        %777 = vmatmul.f32.gmra.mxu0 %v456
        %v778 = vpop.f32.mrf.mxu0
        %v779 = vadd.f32 0.0, %v778
        %780 = vmatmul.f32.gmra.mxu0 %v756
        %v781 = vpop.f32.mrf.mxu0
        %v782 = vadd.f32 0.0, %v781
        %783 = vdwg.mxu0
        %v784 = vadd.f32 %v751, %v776
        %v785 = vadd.f32 %v752, %v779
        %v786 = vadd.f32 %v753, %v782
        %v787 = vld [vmem:[%s2] sm:$0x1]
        %v789 = vperm.slane %v787, 0
        %v791 = vadd.f32 %v784, %v789
        %v792 = vadd.f32 %v785, %v789
        %v793 = vadd.f32 %v786, %v789
        %v794 = vmax.f32 %v791, 0.0
        %v795 = vmax.f32 %v792, 0.0
        %v796 = vmax.f32 %v793, 0.0
        %v797 = vld [vmem:[#allocation2] sm:$0xff]
        %v798 = vld [vmem:[#allocation2 + $0x8] sm:$0xff]
        %s799 = scalar_lea.vmem [#allocation2], 16
        %v800 = vld [vmem:[%s799] sm:$0xff]
        %v801 = vld [vmem:[%s799 + $0x8] sm:$0xff]
        %v805 = vrot.slane %v794, 1
        %v806 = vrot.slane %v795, 1
        %v807 = vsel %vm411, %v805, %v806
        %v808 = vrot.slane %v796, 1
        %v809 = vsel %vm411, %v806, %v808
        %vm810 = vcmask 130048
        %v811 = vsel %vm810, %v807, 0
        %v813 = vsel %vm810, %v809, 0
        %815 = vmatpush.msra.mxu0 0.0
        %816 = vmatpush.msra.mxu0 0.0
        %817 = vmatpush.msra.mxu0 0.0
        %818 = vmatpush.msra.mxu0 0.0
        %819 = vmatpush.msra.mxu0 0.0
        %820 = vmatpush.msra.mxu0 0.0
        %821 = vmatpush.msra.mxu0 0.0
        %822 = vmatpush.msra.mxu0 0.0
        %823 = vmatpush.msra.mxu0 0.0
        %824 = vmatpush.msra.mxu0 0.0
        %825 = vmatpush.msra.mxu0 0.0
        %826 = vmatpush.msra.mxu0 0.0
        %827 = vmatpush.msra.mxu0 0.0
        %828 = vmatpush.msra.mxu0 0.0
        %829 = vmatpush.msra.mxu0 %v801
        %830 = vmatpush.msra.mxu0 %v800
        %831 = vmatmul.f32.gmra.mxu0 %v811
        %v832 = vpop.f32.mrf.mxu0
        %v833 = vadd.f32 0.0, %v832
        %834 = vmatmul.f32.gmra.mxu0 %v813
        %v835 = vpop.f32.mrf.mxu0
        %v836 = vadd.f32 0.0, %v835
        %837 = vdwg.mxu0
        %v838 = vsel %vm810, %v794, 0
        %v840 = vsel %vm810, %v795, 0
        %842 = vmatpush.msra.mxu0 0.0
        %843 = vmatpush.msra.mxu0 0.0
        %844 = vmatpush.msra.mxu0 0.0
        %845 = vmatpush.msra.mxu0 0.0
        %846 = vmatpush.msra.mxu0 0.0
        %847 = vmatpush.msra.mxu0 0.0
        %848 = vmatpush.msra.mxu0 0.0
        %849 = vmatpush.msra.mxu0 0.0
        %850 = vmatpush.msra.mxu0 0.0
        %851 = vmatpush.msra.mxu0 0.0
        %852 = vmatpush.msra.mxu0 0.0
        %853 = vmatpush.msra.mxu0 0.0
        %854 = vmatpush.msra.mxu0 0.0
        %855 = vmatpush.msra.mxu0 0.0
        %856 = vmatpush.msra.mxu0 %v798
        %857 = vmatpush.msra.mxu0 %v797
        %858 = vmatmul.f32.gmra.mxu0 %v838
        %v859 = vpop.f32.mrf.mxu0
        %v860 = vadd.f32 %v833, %v859
        %861 = vmatmul.f32.gmra.mxu0 %v840
        %v862 = vpop.f32.mrf.mxu0
        %v863 = vadd.f32 %v836, %v862
        %864 = vdwg.mxu0
        %s865 = scalar_lea.vmem [#allocation2], 32
        %v866 = vld [vmem:[%s865] sm:$0xff]
        %v867 = vld [vmem:[%s865 + $0x8] sm:$0xff]
        %v868 = vrot.slane %v794, 2
        %v869 = vrot.slane %v795, 2
        %v870 = vsel %vm486, %v868, %v869
        %v871 = vrot.slane %v796, 2
        %v872 = vsel %vm486, %v869, %v871
        %v873 = vsel %vm810, %v870, 0
        %v875 = vsel %vm810, %v872, 0
        %877 = vmatpush.msra.mxu0 0.0
        %878 = vmatpush.msra.mxu0 0.0
        %879 = vmatpush.msra.mxu0 0.0
        %880 = vmatpush.msra.mxu0 0.0
        %881 = vmatpush.msra.mxu0 0.0
        %882 = vmatpush.msra.mxu0 0.0
        %883 = vmatpush.msra.mxu0 0.0
        %884 = vmatpush.msra.mxu0 0.0
        %885 = vmatpush.msra.mxu0 0.0
        %886 = vmatpush.msra.mxu0 0.0
        %887 = vmatpush.msra.mxu0 0.0
        %888 = vmatpush.msra.mxu0 0.0
        %889 = vmatpush.msra.mxu0 0.0
        %890 = vmatpush.msra.mxu0 0.0
        %891 = vmatpush.msra.mxu0 %v867
        %892 = vmatpush.msra.mxu0 %v866
        %893 = vmatmul.f32.gmra.mxu0 %v873
        %v894 = vpop.f32.mrf.mxu0
        %v895 = vadd.f32 0.0, %v894
        %896 = vmatmul.f32.gmra.mxu0 %v875
        %v897 = vpop.f32.mrf.mxu0
        %v898 = vadd.f32 0.0, %v897
        %899 = vdwg.mxu0
        %v900 = vadd.f32 %v860, %v895
        %v901 = vadd.f32 %v863, %v898
        %s902 = scalar_lea.vmem [#allocation2], 48
        %v903 = vld [vmem:[%s902] sm:$0xff]
        %v904 = vld [vmem:[%s902 + $0x8] sm:$0xff]
        %v905 = vrot.slane %v794, 3
        %v906 = vrot.slane %v795, 3
        %v907 = vsel %vm531, %v905, %v906
        %v908 = vrot.slane %v796, 3
        %v909 = vsel %vm531, %v906, %v908
        %v910 = vsel %vm810, %v907, 0
        %v912 = vsel %vm810, %v909, 0
        %914 = vmatpush.msra.mxu0 0.0
        %915 = vmatpush.msra.mxu0 0.0
        %916 = vmatpush.msra.mxu0 0.0
        %917 = vmatpush.msra.mxu0 0.0
        %918 = vmatpush.msra.mxu0 0.0
        %919 = vmatpush.msra.mxu0 0.0
        %920 = vmatpush.msra.mxu0 0.0
        %921 = vmatpush.msra.mxu0 0.0
        %922 = vmatpush.msra.mxu0 0.0
        %923 = vmatpush.msra.mxu0 0.0
        %924 = vmatpush.msra.mxu0 0.0
        %925 = vmatpush.msra.mxu0 0.0
        %926 = vmatpush.msra.mxu0 0.0
        %927 = vmatpush.msra.mxu0 0.0
        %928 = vmatpush.msra.mxu0 %v904
        %929 = vmatpush.msra.mxu0 %v903
        %930 = vmatmul.f32.gmra.mxu0 %v910
        %v931 = vpop.f32.mrf.mxu0
        %v932 = vadd.f32 0.0, %v931
        %933 = vmatmul.f32.gmra.mxu0 %v912
        %v934 = vpop.f32.mrf.mxu0
        %v935 = vadd.f32 0.0, %v934
        %936 = vdwg.mxu0
        %v937 = vadd.f32 %v900, %v932
        %v938 = vadd.f32 %v901, %v935
        %s939 = scalar_lea.vmem [#allocation2], 64
        %v940 = vld [vmem:[%s939] sm:$0xff]
        %v941 = vld [vmem:[%s939 + $0x8] sm:$0xff]
        %v942 = vrot.slane %v794, 4
        %v943 = vrot.slane %v795, 4
        %v944 = vsel %vm576, %v942, %v943
        %v945 = vrot.slane %v796, 4
        %v946 = vsel %vm576, %v943, %v945
        %v947 = vsel %vm810, %v944, 0
        %v949 = vsel %vm810, %v946, 0
        %951 = vmatpush.msra.mxu0 0.0
        %952 = vmatpush.msra.mxu0 0.0
        %953 = vmatpush.msra.mxu0 0.0
        %954 = vmatpush.msra.mxu0 0.0
        %955 = vmatpush.msra.mxu0 0.0
        %956 = vmatpush.msra.mxu0 0.0
        %957 = vmatpush.msra.mxu0 0.0
        %958 = vmatpush.msra.mxu0 0.0
        %959 = vmatpush.msra.mxu0 0.0
        %960 = vmatpush.msra.mxu0 0.0
        %961 = vmatpush.msra.mxu0 0.0
        %962 = vmatpush.msra.mxu0 0.0
        %963 = vmatpush.msra.mxu0 0.0
        %964 = vmatpush.msra.mxu0 0.0
        %965 = vmatpush.msra.mxu0 %v941
        %966 = vmatpush.msra.mxu0 %v940
        %967 = vmatmul.f32.gmra.mxu0 %v947
        %v968 = vpop.f32.mrf.mxu0
        %v969 = vadd.f32 0.0, %v968
        %970 = vmatmul.f32.gmra.mxu0 %v949
        %v971 = vpop.f32.mrf.mxu0
        %v972 = vadd.f32 0.0, %v971
        %973 = vdwg.mxu0
        %v974 = vadd.f32 %v937, %v969
        %v975 = vadd.f32 %v938, %v972
        %s976 = scalar_lea.vmem [#allocation2], 80
        %v977 = vld [vmem:[%s976] sm:$0xff]
        %v978 = vld [vmem:[%s976 + $0x8] sm:$0xff]
        %v979 = vrot.slane %v794, 5
        %v980 = vrot.slane %v795, 5
        %v981 = vsel %vm621, %v979, %v980
        %v982 = vrot.slane %v796, 5
        %v983 = vsel %vm621, %v980, %v982
        %v984 = vsel %vm810, %v981, 0
        %v986 = vsel %vm810, %v983, 0
        %988 = vmatpush.msra.mxu0 0.0
        %989 = vmatpush.msra.mxu0 0.0
        %990 = vmatpush.msra.mxu0 0.0
        %991 = vmatpush.msra.mxu0 0.0
        %992 = vmatpush.msra.mxu0 0.0
        %993 = vmatpush.msra.mxu0 0.0
        %994 = vmatpush.msra.mxu0 0.0
        %995 = vmatpush.msra.mxu0 0.0
        %996 = vmatpush.msra.mxu0 0.0
        %997 = vmatpush.msra.mxu0 0.0
        %998 = vmatpush.msra.mxu0 0.0
        %999 = vmatpush.msra.mxu0 0.0
        %1000 = vmatpush.msra.mxu0 0.0
        %1001 = vmatpush.msra.mxu0 0.0
        %1002 = vmatpush.msra.mxu0 %v978
        %1003 = vmatpush.msra.mxu0 %v977
        %1004 = vmatmul.f32.gmra.mxu0 %v984
        %v1005 = vpop.f32.mrf.mxu0
        %v1006 = vadd.f32 0.0, %v1005
        %1007 = vmatmul.f32.gmra.mxu0 %v986
        %v1008 = vpop.f32.mrf.mxu0
        %v1009 = vadd.f32 0.0, %v1008
        %1010 = vdwg.mxu0
        %v1011 = vadd.f32 %v974, %v1006
        %v1012 = vadd.f32 %v975, %v1009
        %s1013 = scalar_lea.vmem [#allocation2], 96
        %v1014 = vld [vmem:[%s1013] sm:$0xff]
        %v1015 = vld [vmem:[%s1013 + $0x8] sm:$0xff]
        %v1016 = vrot.slane %v794, 6
        %v1017 = vrot.slane %v795, 6
        %v1018 = vsel %vm666, %v1016, %v1017
        %v1019 = vrot.slane %v796, 6
        %v1020 = vsel %vm666, %v1017, %v1019
        %v1021 = vsel %vm810, %v1018, 0
        %v1023 = vsel %vm810, %v1020, 0
        %1025 = vmatpush.msra.mxu0 0.0
        %1026 = vmatpush.msra.mxu0 0.0
        %1027 = vmatpush.msra.mxu0 0.0
        %1028 = vmatpush.msra.mxu0 0.0
        %1029 = vmatpush.msra.mxu0 0.0
        %1030 = vmatpush.msra.mxu0 0.0
        %1031 = vmatpush.msra.mxu0 0.0
        %1032 = vmatpush.msra.mxu0 0.0
        %1033 = vmatpush.msra.mxu0 0.0
        %1034 = vmatpush.msra.mxu0 0.0
        %1035 = vmatpush.msra.mxu0 0.0
        %1036 = vmatpush.msra.mxu0 0.0
        %1037 = vmatpush.msra.mxu0 0.0
        %1038 = vmatpush.msra.mxu0 0.0
        %1039 = vmatpush.msra.mxu0 %v1015
        %1040 = vmatpush.msra.mxu0 %v1014
        %1041 = vmatmul.f32.gmra.mxu0 %v1021
        %v1042 = vpop.f32.mrf.mxu0
        %v1043 = vadd.f32 0.0, %v1042
        %1044 = vmatmul.f32.gmra.mxu0 %v1023
        %v1045 = vpop.f32.mrf.mxu0
        %v1046 = vadd.f32 0.0, %v1045
        %1047 = vdwg.mxu0
        %v1048 = vadd.f32 %v1011, %v1043
        %v1049 = vadd.f32 %v1012, %v1046
        %s1050 = scalar_lea.vmem [#allocation2], 112
        %v1051 = vld [vmem:[%s1050] sm:$0xff]
        %v1052 = vld [vmem:[%s1050 + $0x8] sm:$0xff]
        %v1053 = vrot.slane %v794, 7
        %v1054 = vrot.slane %v795, 7
        %v1055 = vsel %vm711, %v1053, %v1054
        %v1056 = vrot.slane %v796, 7
        %v1057 = vsel %vm711, %v1054, %v1056
        %v1058 = vsel %vm810, %v1055, 0
        %v1060 = vsel %vm810, %v1057, 0
        %1062 = vmatpush.msra.mxu0 0.0
        %1063 = vmatpush.msra.mxu0 0.0
        %1064 = vmatpush.msra.mxu0 0.0
        %1065 = vmatpush.msra.mxu0 0.0
        %1066 = vmatpush.msra.mxu0 0.0
        %1067 = vmatpush.msra.mxu0 0.0
        %1068 = vmatpush.msra.mxu0 0.0
        %1069 = vmatpush.msra.mxu0 0.0
        %1070 = vmatpush.msra.mxu0 0.0
        %1071 = vmatpush.msra.mxu0 0.0
        %1072 = vmatpush.msra.mxu0 0.0
        %1073 = vmatpush.msra.mxu0 0.0
        %1074 = vmatpush.msra.mxu0 0.0
        %1075 = vmatpush.msra.mxu0 0.0
        %1076 = vmatpush.msra.mxu0 %v1052
        %1077 = vmatpush.msra.mxu0 %v1051
        %1078 = vmatmul.f32.gmra.mxu0 %v1058
        %v1079 = vpop.f32.mrf.mxu0
        %v1080 = vadd.f32 0.0, %v1079
        %1081 = vmatmul.f32.gmra.mxu0 %v1060
        %v1082 = vpop.f32.mrf.mxu0
        %v1083 = vadd.f32 0.0, %v1082
        %1084 = vdwg.mxu0
        %v1085 = vadd.f32 %v1048, %v1080
        %v1086 = vadd.f32 %v1049, %v1083
        %s1087 = scalar_lea.vmem [#allocation2], 128
        %v1088 = vld [vmem:[%s1087] sm:$0xff]
        %v1089 = vld [vmem:[%s1087 + $0x8] sm:$0xff]
        %v1090 = vsel %vm810, %v796, 0
        %1092 = vmatpush.msra.mxu0 0.0
        %1093 = vmatpush.msra.mxu0 0.0
        %1094 = vmatpush.msra.mxu0 0.0
        %1095 = vmatpush.msra.mxu0 0.0
        %1096 = vmatpush.msra.mxu0 0.0
        %1097 = vmatpush.msra.mxu0 0.0
        %1098 = vmatpush.msra.mxu0 0.0
        %1099 = vmatpush.msra.mxu0 0.0
        %1100 = vmatpush.msra.mxu0 0.0
        %1101 = vmatpush.msra.mxu0 0.0
        %1102 = vmatpush.msra.mxu0 0.0
        %1103 = vmatpush.msra.mxu0 0.0
        %1104 = vmatpush.msra.mxu0 0.0
        %1105 = vmatpush.msra.mxu0 0.0
        %1106 = vmatpush.msra.mxu0 %v1089
        %1107 = vmatpush.msra.mxu0 %v1088
        %1108 = vmatmul.f32.gmra.mxu0 %v840
        %v1109 = vpop.f32.mrf.mxu0
        %v1110 = vadd.f32 0.0, %v1109
        %1111 = vmatmul.f32.gmra.mxu0 %v1090
        %v1112 = vpop.f32.mrf.mxu0
        %v1113 = vadd.f32 0.0, %v1112
        %1114 = vdwg.mxu0
        %v1115 = vadd.f32 %v1085, %v1110
        %v1116 = vadd.f32 %v1086, %v1113
        %v1117 = vld [vmem:[%s4] sm:$0x1]
        %v1119 = vperm.slane %v1117, 0
        %v1121 = vadd.f32 %v1115, %v1119
        %v1122 = vadd.f32 %v1116, %v1119
        %v1123 = vmax.f32 %v1121, 0.0
        %v1124 = vmax.f32 %v1122, 0.0
        %v1125 = vld [vmem:[%s5] sm:$0xff]
        %v1126 = vld [vmem:[%s5 + $0x8] sm:$0xff]
        %s1127 = scalar_lea.vmem %s5, 16
        %v1128 = vld [vmem:[%s1127] sm:$0xff]
        %v1129 = vld [vmem:[%s1127 + $0x8] sm:$0xff]
        %v1131 = vrot.slane %v1123, 1
        %v1132 = vsel %vm810, %v1131, 0
        %1134 = vmatpush.msra.mxu0 0.0
        %1135 = vmatpush.msra.mxu0 0.0
        %1136 = vmatpush.msra.mxu0 0.0
        %1137 = vmatpush.msra.mxu0 0.0
        %1138 = vmatpush.msra.mxu0 0.0
        %1139 = vmatpush.msra.mxu0 0.0
        %1140 = vmatpush.msra.mxu0 0.0
        %1141 = vmatpush.msra.mxu0 0.0
        %1142 = vmatpush.msra.mxu0 0.0
        %1143 = vmatpush.msra.mxu0 0.0
        %1144 = vmatpush.msra.mxu0 0.0
        %1145 = vmatpush.msra.mxu0 0.0
        %1146 = vmatpush.msra.mxu0 0.0
        %1147 = vmatpush.msra.mxu0 0.0
        %1148 = vmatpush.msra.mxu0 %v1129
        %1149 = vmatpush.msra.mxu0 %v1128
        %1150 = vmatmul.f32.gmra.mxu0 %v1132
        %v1151 = vpop.f32.mrf.mxu0
        %v1152 = vadd.f32 0.0, %v1151
        %1153 = vdwg.mxu0
        %v1154 = vsel %vm810, %v1123, 0
        %1156 = vmatpush.msra.mxu0 0.0
        %1157 = vmatpush.msra.mxu0 0.0
        %1158 = vmatpush.msra.mxu0 0.0
        %1159 = vmatpush.msra.mxu0 0.0
        %1160 = vmatpush.msra.mxu0 0.0
        %1161 = vmatpush.msra.mxu0 0.0
        %1162 = vmatpush.msra.mxu0 0.0
        %1163 = vmatpush.msra.mxu0 0.0
        %1164 = vmatpush.msra.mxu0 0.0
        %1165 = vmatpush.msra.mxu0 0.0
        %1166 = vmatpush.msra.mxu0 0.0
        %1167 = vmatpush.msra.mxu0 0.0
        %1168 = vmatpush.msra.mxu0 0.0
        %1169 = vmatpush.msra.mxu0 0.0
        %1170 = vmatpush.msra.mxu0 %v1126
        %1171 = vmatpush.msra.mxu0 %v1125
        %1172 = vmatmul.f32.gmra.mxu0 %v1154
        %v1173 = vpop.f32.mrf.mxu0
        %v1174 = vadd.f32 %v1152, %v1173
        %1175 = vdwg.mxu0
        %s1176 = scalar_lea.vmem %s5, 32
        %v1177 = vld [vmem:[%s1176] sm:$0xff]
        %v1178 = vld [vmem:[%s1176 + $0x8] sm:$0xff]
        %v1179 = vrot.slane %v1123, 2
        %v1180 = vsel %vm810, %v1179, 0
        %1182 = vmatpush.msra.mxu0 0.0
        %1183 = vmatpush.msra.mxu0 0.0
        %1184 = vmatpush.msra.mxu0 0.0
        %1185 = vmatpush.msra.mxu0 0.0
        %1186 = vmatpush.msra.mxu0 0.0
        %1187 = vmatpush.msra.mxu0 0.0
        %1188 = vmatpush.msra.mxu0 0.0
        %1189 = vmatpush.msra.mxu0 0.0
        %1190 = vmatpush.msra.mxu0 0.0
        %1191 = vmatpush.msra.mxu0 0.0
        %1192 = vmatpush.msra.mxu0 0.0
        %1193 = vmatpush.msra.mxu0 0.0
        %1194 = vmatpush.msra.mxu0 0.0
        %1195 = vmatpush.msra.mxu0 0.0
        %1196 = vmatpush.msra.mxu0 %v1178
        %1197 = vmatpush.msra.mxu0 %v1177
        %1198 = vmatmul.f32.gmra.mxu0 %v1180
        %v1199 = vpop.f32.mrf.mxu0
        %v1200 = vadd.f32 0.0, %v1199
        %1201 = vdwg.mxu0
        %v1202 = vadd.f32 %v1174, %v1200
        %s1203 = scalar_lea.vmem %s5, 48
        %v1204 = vld [vmem:[%s1203] sm:$0xff]
        %v1205 = vld [vmem:[%s1203 + $0x8] sm:$0xff]
        %v1207 = vrot.slane %v1123, 3
        %v1208 = vrot.slane %v1124, 3
        %v1209 = vsel %vm531, %v1207, %v1208
        %v1210 = vsel %vm810, %v1209, 0
        %1212 = vmatpush.msra.mxu0 0.0
        %1213 = vmatpush.msra.mxu0 0.0
        %1214 = vmatpush.msra.mxu0 0.0
        %1215 = vmatpush.msra.mxu0 0.0
        %1216 = vmatpush.msra.mxu0 0.0
        %1217 = vmatpush.msra.mxu0 0.0
        %1218 = vmatpush.msra.mxu0 0.0
        %1219 = vmatpush.msra.mxu0 0.0
        %1220 = vmatpush.msra.mxu0 0.0
        %1221 = vmatpush.msra.mxu0 0.0
        %1222 = vmatpush.msra.mxu0 0.0
        %1223 = vmatpush.msra.mxu0 0.0
        %1224 = vmatpush.msra.mxu0 0.0
        %1225 = vmatpush.msra.mxu0 0.0
        %1226 = vmatpush.msra.mxu0 %v1205
        %1227 = vmatpush.msra.mxu0 %v1204
        %1228 = vmatmul.f32.gmra.mxu0 %v1210
        %v1229 = vpop.f32.mrf.mxu0
        %v1230 = vadd.f32 0.0, %v1229
        %1231 = vdwg.mxu0
        %v1232 = vadd.f32 %v1202, %v1230
        %s1233 = scalar_lea.vmem %s5, 64
        %v1234 = vld [vmem:[%s1233] sm:$0xff]
        %v1235 = vld [vmem:[%s1233 + $0x8] sm:$0xff]
        %v1236 = vrot.slane %v1123, 4
        %v1237 = vrot.slane %v1124, 4
        %v1238 = vsel %vm576, %v1236, %v1237
        %v1239 = vsel %vm810, %v1238, 0
        %1241 = vmatpush.msra.mxu0 0.0
        %1242 = vmatpush.msra.mxu0 0.0
        %1243 = vmatpush.msra.mxu0 0.0
        %1244 = vmatpush.msra.mxu0 0.0
        %1245 = vmatpush.msra.mxu0 0.0
        %1246 = vmatpush.msra.mxu0 0.0
        %1247 = vmatpush.msra.mxu0 0.0
        %1248 = vmatpush.msra.mxu0 0.0
        %1249 = vmatpush.msra.mxu0 0.0
        %1250 = vmatpush.msra.mxu0 0.0
        %1251 = vmatpush.msra.mxu0 0.0
        %1252 = vmatpush.msra.mxu0 0.0
        %1253 = vmatpush.msra.mxu0 0.0
        %1254 = vmatpush.msra.mxu0 0.0
        %1255 = vmatpush.msra.mxu0 %v1235
        %1256 = vmatpush.msra.mxu0 %v1234
        %1257 = vmatmul.f32.gmra.mxu0 %v1239
        %v1258 = vpop.f32.mrf.mxu0
        %v1259 = vadd.f32 0.0, %v1258
        %1260 = vdwg.mxu0
        %v1261 = vadd.f32 %v1232, %v1259
        %s1262 = scalar_lea.vmem %s5, 80
        %v1263 = vld [vmem:[%s1262] sm:$0xff]
        %v1264 = vld [vmem:[%s1262 + $0x8] sm:$0xff]
        %v1265 = vrot.slane %v1123, 5
        %v1266 = vrot.slane %v1124, 5
        %v1267 = vsel %vm621, %v1265, %v1266
        %v1268 = vsel %vm810, %v1267, 0
        %1270 = vmatpush.msra.mxu0 0.0
        %1271 = vmatpush.msra.mxu0 0.0
        %1272 = vmatpush.msra.mxu0 0.0
        %1273 = vmatpush.msra.mxu0 0.0
        %1274 = vmatpush.msra.mxu0 0.0
        %1275 = vmatpush.msra.mxu0 0.0
        %1276 = vmatpush.msra.mxu0 0.0
        %1277 = vmatpush.msra.mxu0 0.0
        %1278 = vmatpush.msra.mxu0 0.0
        %1279 = vmatpush.msra.mxu0 0.0
        %1280 = vmatpush.msra.mxu0 0.0
        %1281 = vmatpush.msra.mxu0 0.0
        %1282 = vmatpush.msra.mxu0 0.0
        %1283 = vmatpush.msra.mxu0 0.0
        %1284 = vmatpush.msra.mxu0 %v1264
        %1285 = vmatpush.msra.mxu0 %v1263
        %1286 = vmatmul.f32.gmra.mxu0 %v1268
        %v1287 = vpop.f32.mrf.mxu0
        %v1288 = vadd.f32 0.0, %v1287
        %1289 = vdwg.mxu0
        %v1290 = vadd.f32 %v1261, %v1288
        %s1291 = scalar_lea.vmem %s5, 96
        %v1292 = vld [vmem:[%s1291] sm:$0xff]
        %v1293 = vld [vmem:[%s1291 + $0x8] sm:$0xff]
        %v1294 = vrot.slane %v1123, 6
        %v1295 = vrot.slane %v1124, 6
        %v1296 = vsel %vm666, %v1294, %v1295
        %v1297 = vsel %vm810, %v1296, 0
        %1299 = vmatpush.msra.mxu0 0.0
        %1300 = vmatpush.msra.mxu0 0.0
        %1301 = vmatpush.msra.mxu0 0.0
        %1302 = vmatpush.msra.mxu0 0.0
        %1303 = vmatpush.msra.mxu0 0.0
        %1304 = vmatpush.msra.mxu0 0.0
        %1305 = vmatpush.msra.mxu0 0.0
        %1306 = vmatpush.msra.mxu0 0.0
        %1307 = vmatpush.msra.mxu0 0.0
        %1308 = vmatpush.msra.mxu0 0.0
        %1309 = vmatpush.msra.mxu0 0.0
        %1310 = vmatpush.msra.mxu0 0.0
        %1311 = vmatpush.msra.mxu0 0.0
        %1312 = vmatpush.msra.mxu0 0.0
        %1313 = vmatpush.msra.mxu0 %v1293
        %1314 = vmatpush.msra.mxu0 %v1292
        %1315 = vmatmul.f32.gmra.mxu0 %v1297
        %v1316 = vpop.f32.mrf.mxu0
        %v1317 = vadd.f32 0.0, %v1316
        %1318 = vdwg.mxu0
        %v1319 = vadd.f32 %v1290, %v1317
        %s1320 = scalar_lea.vmem %s5, 112
        %v1321 = vld [vmem:[%s1320] sm:$0xff]
        %v1322 = vld [vmem:[%s1320 + $0x8] sm:$0xff]
        %v1323 = vrot.slane %v1123, 7
        %v1324 = vrot.slane %v1124, 7
        %v1325 = vsel %vm711, %v1323, %v1324
        %v1326 = vsel %vm810, %v1325, 0
        %1328 = vmatpush.msra.mxu0 0.0
        %1329 = vmatpush.msra.mxu0 0.0
        %1330 = vmatpush.msra.mxu0 0.0
        %1331 = vmatpush.msra.mxu0 0.0
        %1332 = vmatpush.msra.mxu0 0.0
        %1333 = vmatpush.msra.mxu0 0.0
        %1334 = vmatpush.msra.mxu0 0.0
        %1335 = vmatpush.msra.mxu0 0.0
        %1336 = vmatpush.msra.mxu0 0.0
        %1337 = vmatpush.msra.mxu0 0.0
        %1338 = vmatpush.msra.mxu0 0.0
        %1339 = vmatpush.msra.mxu0 0.0
        %1340 = vmatpush.msra.mxu0 0.0
        %1341 = vmatpush.msra.mxu0 0.0
        %1342 = vmatpush.msra.mxu0 %v1322
        %1343 = vmatpush.msra.mxu0 %v1321
        %1344 = vmatmul.f32.gmra.mxu0 %v1326
        %v1345 = vpop.f32.mrf.mxu0
        %v1346 = vadd.f32 0.0, %v1345
        %1347 = vdwg.mxu0
        %v1348 = vadd.f32 %v1319, %v1346
        %s1349 = scalar_lea.vmem %s5, 128
        %v1350 = vld [vmem:[%s1349] sm:$0xff]
        %v1351 = vld [vmem:[%s1349 + $0x8] sm:$0xff]
        %v1352 = vsel %vm810, %v1124, 0
        %1354 = vmatpush.msra.mxu0 0.0
        %1355 = vmatpush.msra.mxu0 0.0
        %1356 = vmatpush.msra.mxu0 0.0
        %1357 = vmatpush.msra.mxu0 0.0
        %1358 = vmatpush.msra.mxu0 0.0
        %1359 = vmatpush.msra.mxu0 0.0
        %1360 = vmatpush.msra.mxu0 0.0
        %1361 = vmatpush.msra.mxu0 0.0
        %1362 = vmatpush.msra.mxu0 0.0
        %1363 = vmatpush.msra.mxu0 0.0
        %1364 = vmatpush.msra.mxu0 0.0
        %1365 = vmatpush.msra.mxu0 0.0
        %1366 = vmatpush.msra.mxu0 0.0
        %1367 = vmatpush.msra.mxu0 0.0
        %1368 = vmatpush.msra.mxu0 %v1351
        %1369 = vmatpush.msra.mxu0 %v1350
        %1370 = vmatmul.f32.gmra.mxu0 %v1352
        %v1371 = vpop.f32.mrf.mxu0
        %v1372 = vadd.f32 0.0, %v1371
        %1373 = vdwg.mxu0
        %v1374 = vadd.f32 %v1348, %v1372
        %s1375 = scalar_lea.vmem %s5, 144
        %v1376 = vld [vmem:[%s1375] sm:$0xff]
        %v1377 = vld [vmem:[%s1375 + $0x8] sm:$0xff]
        %v1378 = vrot.slane %v1124, 1
        %v1379 = vsel %vm810, %v1378, 0
        %1381 = vmatpush.msra.mxu0 0.0
        %1382 = vmatpush.msra.mxu0 0.0
        %1383 = vmatpush.msra.mxu0 0.0
        %1384 = vmatpush.msra.mxu0 0.0
        %1385 = vmatpush.msra.mxu0 0.0
        %1386 = vmatpush.msra.mxu0 0.0
        %1387 = vmatpush.msra.mxu0 0.0
        %1388 = vmatpush.msra.mxu0 0.0
        %1389 = vmatpush.msra.mxu0 0.0
        %1390 = vmatpush.msra.mxu0 0.0
        %1391 = vmatpush.msra.mxu0 0.0
        %1392 = vmatpush.msra.mxu0 0.0
        %1393 = vmatpush.msra.mxu0 0.0
        %1394 = vmatpush.msra.mxu0 0.0
        %1395 = vmatpush.msra.mxu0 %v1377
        %1396 = vmatpush.msra.mxu0 %v1376
        %1397 = vmatmul.f32.gmra.mxu0 %v1379
        %v1398 = vpop.f32.mrf.mxu0
        %v1399 = vadd.f32 0.0, %v1398
        %1400 = vdwg.mxu0
        %v1401 = vadd.f32 %v1374, %v1399
        %s1402 = scalar_lea.vmem %s5, 160
        %v1403 = vld [vmem:[%s1402] sm:$0xff]
        %v1404 = vld [vmem:[%s1402 + $0x8] sm:$0xff]
        %v1405 = vrot.slane %v1124, 2
        %v1406 = vsel %vm810, %v1405, 0
        %1408 = vmatpush.msra.mxu0 0.0
        %1409 = vmatpush.msra.mxu0 0.0
        %1410 = vmatpush.msra.mxu0 0.0
        %1411 = vmatpush.msra.mxu0 0.0
        %1412 = vmatpush.msra.mxu0 0.0
        %1413 = vmatpush.msra.mxu0 0.0
        %1414 = vmatpush.msra.mxu0 0.0
        %1415 = vmatpush.msra.mxu0 0.0
        %1416 = vmatpush.msra.mxu0 0.0
        %1417 = vmatpush.msra.mxu0 0.0
        %1418 = vmatpush.msra.mxu0 0.0
        %1419 = vmatpush.msra.mxu0 0.0
        %1420 = vmatpush.msra.mxu0 0.0
        %1421 = vmatpush.msra.mxu0 0.0
        %1422 = vmatpush.msra.mxu0 %v1404
        %1423 = vmatpush.msra.mxu0 %v1403
        %1424 = vmatmul.f32.gmra.mxu0 %v1406
        %v1425 = vpop.f32.mrf.mxu0
        %v1426 = vadd.f32 0.0, %v1425
        %1427 = vdwg.mxu0
        %v1428 = vadd.f32 %v1401, %v1426
        %v1429 = vld [vmem:[%s6] sm:$0x1]
        %v1431 = vperm.slane %v1429, 0
        %v1433 = vadd.f32 %v1428, %v1431
        %v1434 = vmax.f32 %v1433, 0.0
        %v1435 = vld [vmem:[%s8] sm:$0xf]
        %v1436 = vld [vmem:[%s7] sm:$0xff]
        %v1437 = vld [vmem:[%s7 + $0x8] sm:$0xff]
        %v1438 = vld [vmem:[%s7 + $0x10] sm:$0xff]
        %v1439 = vld [vmem:[%s7 + $0x18] sm:$0xff]
        %v1440 = vld [vmem:[%s7 + $0x20] sm:$0xff]
        %v1441 = vld [vmem:[%s7 + $0x28] sm:$0xff]
        %v1442 = vld [vmem:[%s7 + $0x30] sm:$0xff]
        %v1443 = vld [vmem:[%s7 + $0x38] sm:$0xff]
        %v1445 = vsel %vm810, %v1434, 0
        %1447 = vmatpush.msra.mxu0 0.0
        %1448 = vmatpush.msra.mxu0 0.0
        %1449 = vmatpush.msra.mxu0 0.0
        %1450 = vmatpush.msra.mxu0 0.0
        %1451 = vmatpush.msra.mxu0 0.0
        %1452 = vmatpush.msra.mxu0 0.0
        %1453 = vmatpush.msra.mxu0 0.0
        %1454 = vmatpush.msra.mxu0 0.0
        %1455 = vmatpush.msra.mxu0 0.0
        %1456 = vmatpush.msra.mxu0 0.0
        %1457 = vmatpush.msra.mxu0 0.0
        %1458 = vmatpush.msra.mxu0 0.0
        %1459 = vmatpush.msra.mxu0 0.0
        %1460 = vmatpush.msra.mxu0 0.0
        %1461 = vmatpush.msra.mxu0 %v1440
        %1462 = vmatpush.msra.mxu0 %v1436
        %1463 = vmatmul.f32.gmra.mxu0 %v1445
        %v1464 = vpop.f32.mrf.mxu0
        %v1465 = vadd.f32 0.0, %v1464
        %1466 = vdwg.mxu0
        %1467 = vmatpush.msra.mxu0 0.0
        %1468 = vmatpush.msra.mxu0 0.0
        %1469 = vmatpush.msra.mxu0 0.0
        %1470 = vmatpush.msra.mxu0 0.0
        %1471 = vmatpush.msra.mxu0 0.0
        %1472 = vmatpush.msra.mxu0 0.0
        %1473 = vmatpush.msra.mxu0 0.0
        %1474 = vmatpush.msra.mxu0 0.0
        %1475 = vmatpush.msra.mxu0 0.0
        %1476 = vmatpush.msra.mxu0 0.0
        %1477 = vmatpush.msra.mxu0 0.0
        %1478 = vmatpush.msra.mxu0 0.0
        %1479 = vmatpush.msra.mxu0 0.0
        %1480 = vmatpush.msra.mxu0 0.0
        %1481 = vmatpush.msra.mxu0 %v1441
        %1482 = vmatpush.msra.mxu0 %v1437
        %1483 = vmatmul.f32.gmra.mxu0 %v1445
        %v1484 = vpop.f32.mrf.mxu0
        %v1485 = vadd.f32 0.0, %v1484
        %1486 = vdwg.mxu0
        %1487 = vmatpush.msra.mxu0 0.0
        %1488 = vmatpush.msra.mxu0 0.0
        %1489 = vmatpush.msra.mxu0 0.0
        %1490 = vmatpush.msra.mxu0 0.0
        %1491 = vmatpush.msra.mxu0 0.0
        %1492 = vmatpush.msra.mxu0 0.0
        %1493 = vmatpush.msra.mxu0 0.0
        %1494 = vmatpush.msra.mxu0 0.0
        %1495 = vmatpush.msra.mxu0 0.0
        %1496 = vmatpush.msra.mxu0 0.0
        %1497 = vmatpush.msra.mxu0 0.0
        %1498 = vmatpush.msra.mxu0 0.0
        %1499 = vmatpush.msra.mxu0 0.0
        %1500 = vmatpush.msra.mxu0 0.0
        %1501 = vmatpush.msra.mxu0 %v1442
        %1502 = vmatpush.msra.mxu0 %v1438
        %1503 = vmatmul.f32.gmra.mxu0 %v1445
        %v1504 = vpop.f32.mrf.mxu0
        %v1505 = vadd.f32 0.0, %v1504
        %1506 = vdwg.mxu0
        %1507 = vmatpush.msra.mxu0 0.0
        %1508 = vmatpush.msra.mxu0 0.0
        %1509 = vmatpush.msra.mxu0 0.0
        %1510 = vmatpush.msra.mxu0 0.0
        %1511 = vmatpush.msra.mxu0 0.0
        %1512 = vmatpush.msra.mxu0 0.0
        %1513 = vmatpush.msra.mxu0 0.0
        %1514 = vmatpush.msra.mxu0 0.0
        %1515 = vmatpush.msra.mxu0 0.0
        %1516 = vmatpush.msra.mxu0 0.0
        %1517 = vmatpush.msra.mxu0 0.0
        %1518 = vmatpush.msra.mxu0 0.0
        %1519 = vmatpush.msra.mxu0 0.0
        %1520 = vmatpush.msra.mxu0 0.0
        %1521 = vmatpush.msra.mxu0 %v1443
        %1522 = vmatpush.msra.mxu0 %v1439
        %1523 = vmatmul.f32.gmra.mxu0 %v1445
        %v1524 = vpop.f32.mrf.mxu0
        %v1525 = vadd.f32 0.0, %v1524
        %1526 = vdwg.mxu0
        %v1531 = vrot.slane %v1485, 7
        %v1532 = vrot.slane %v1505, 6
        %v1533 = vrot.slane %v1525, 5
        %v1534 = vsel %vm711, %v1465, %v1531
        %vm1535 = vcmask 1042434
        %v1536 = vsel %vm1535, %v1532, %v1533
        %v1537 = vsel %vm666, %v1534, %v1536
        %v1539 = vadd.f32 %v1435, %v1537
        %s1540 = scalar_lea.vmem %s7, 64
        %v1541 = vld [vmem:[%s1540] sm:$0xff]
        %v1542 = vld [vmem:[%s1540 + $0x8] sm:$0xff]
        %v1543 = vld [vmem:[%s1540 + $0x10] sm:$0xff]
        %v1544 = vld [vmem:[%s1540 + $0x18] sm:$0xff]
        %v1545 = vld [vmem:[%s1540 + $0x20] sm:$0xff]
        %v1546 = vld [vmem:[%s1540 + $0x28] sm:$0xff]
        %v1547 = vld [vmem:[%s1540 + $0x30] sm:$0xff]
        %v1548 = vld [vmem:[%s1540 + $0x38] sm:$0xff]
        %v1549 = vrot.slane %v1434, 1
        %v1550 = vsel %vm810, %v1549, 0
        %1552 = vmatpush.msra.mxu0 0.0
        %1553 = vmatpush.msra.mxu0 0.0
        %1554 = vmatpush.msra.mxu0 0.0
        %1555 = vmatpush.msra.mxu0 0.0
        %1556 = vmatpush.msra.mxu0 0.0
        %1557 = vmatpush.msra.mxu0 0.0
        %1558 = vmatpush.msra.mxu0 0.0
        %1559 = vmatpush.msra.mxu0 0.0
        %1560 = vmatpush.msra.mxu0 0.0
        %1561 = vmatpush.msra.mxu0 0.0
        %1562 = vmatpush.msra.mxu0 0.0
        %1563 = vmatpush.msra.mxu0 0.0
        %1564 = vmatpush.msra.mxu0 0.0
        %1565 = vmatpush.msra.mxu0 0.0
        %1566 = vmatpush.msra.mxu0 %v1545
        %1567 = vmatpush.msra.mxu0 %v1541
        %1568 = vmatmul.f32.gmra.mxu0 %v1550
        %v1569 = vpop.f32.mrf.mxu0
        %v1570 = vadd.f32 0.0, %v1569
        %1571 = vdwg.mxu0
        %1572 = vmatpush.msra.mxu0 0.0
        %1573 = vmatpush.msra.mxu0 0.0
        %1574 = vmatpush.msra.mxu0 0.0
        %1575 = vmatpush.msra.mxu0 0.0
        %1576 = vmatpush.msra.mxu0 0.0
        %1577 = vmatpush.msra.mxu0 0.0
        %1578 = vmatpush.msra.mxu0 0.0
        %1579 = vmatpush.msra.mxu0 0.0
        %1580 = vmatpush.msra.mxu0 0.0
        %1581 = vmatpush.msra.mxu0 0.0
        %1582 = vmatpush.msra.mxu0 0.0
        %1583 = vmatpush.msra.mxu0 0.0
        %1584 = vmatpush.msra.mxu0 0.0
        %1585 = vmatpush.msra.mxu0 0.0
        %1586 = vmatpush.msra.mxu0 %v1546
        %1587 = vmatpush.msra.mxu0 %v1542
        %1588 = vmatmul.f32.gmra.mxu0 %v1550
        %v1589 = vpop.f32.mrf.mxu0
        %v1590 = vadd.f32 0.0, %v1589
        %1591 = vdwg.mxu0
        %1592 = vmatpush.msra.mxu0 0.0
        %1593 = vmatpush.msra.mxu0 0.0
        %1594 = vmatpush.msra.mxu0 0.0
        %1595 = vmatpush.msra.mxu0 0.0
        %1596 = vmatpush.msra.mxu0 0.0
        %1597 = vmatpush.msra.mxu0 0.0
        %1598 = vmatpush.msra.mxu0 0.0
        %1599 = vmatpush.msra.mxu0 0.0
        %1600 = vmatpush.msra.mxu0 0.0
        %1601 = vmatpush.msra.mxu0 0.0
        %1602 = vmatpush.msra.mxu0 0.0
        %1603 = vmatpush.msra.mxu0 0.0
        %1604 = vmatpush.msra.mxu0 0.0
        %1605 = vmatpush.msra.mxu0 0.0
        %1606 = vmatpush.msra.mxu0 %v1547
        %1607 = vmatpush.msra.mxu0 %v1543
        %1608 = vmatmul.f32.gmra.mxu0 %v1550
        %v1609 = vpop.f32.mrf.mxu0
        %v1610 = vadd.f32 0.0, %v1609
        %1611 = vdwg.mxu0
        %1612 = vmatpush.msra.mxu0 0.0
        %1613 = vmatpush.msra.mxu0 0.0
        %1614 = vmatpush.msra.mxu0 0.0
        %1615 = vmatpush.msra.mxu0 0.0
        %1616 = vmatpush.msra.mxu0 0.0
        %1617 = vmatpush.msra.mxu0 0.0
        %1618 = vmatpush.msra.mxu0 0.0
        %1619 = vmatpush.msra.mxu0 0.0
        %1620 = vmatpush.msra.mxu0 0.0
        %1621 = vmatpush.msra.mxu0 0.0
        %1622 = vmatpush.msra.mxu0 0.0
        %1623 = vmatpush.msra.mxu0 0.0
        %1624 = vmatpush.msra.mxu0 0.0
        %1625 = vmatpush.msra.mxu0 0.0
        %1626 = vmatpush.msra.mxu0 %v1548
        %1627 = vmatpush.msra.mxu0 %v1544
        %1628 = vmatmul.f32.gmra.mxu0 %v1550
        %v1629 = vpop.f32.mrf.mxu0
        %v1630 = vadd.f32 0.0, %v1629
        %1631 = vdwg.mxu0
        %v1636 = vrot.slane %v1590, 7
        %v1637 = vrot.slane %v1610, 6
        %v1638 = vrot.slane %v1630, 5
        %v1639 = vsel %vm711, %v1570, %v1636
        %v1640 = vsel %vm1535, %v1637, %v1638
        %v1641 = vsel %vm666, %v1639, %v1640
        %v1643 = vadd.f32 %v1539, %v1641
        %s1644 = scalar_lea.vmem %s7, 128
        %v1645 = vld [vmem:[%s1644] sm:$0xff]
        %v1646 = vld [vmem:[%s1644 + $0x8] sm:$0xff]
        %v1647 = vld [vmem:[%s1644 + $0x10] sm:$0xff]
        %v1648 = vld [vmem:[%s1644 + $0x18] sm:$0xff]
        %v1649 = vld [vmem:[%s1644 + $0x20] sm:$0xff]
        %v1650 = vld [vmem:[%s1644 + $0x28] sm:$0xff]
        %v1651 = vld [vmem:[%s1644 + $0x30] sm:$0xff]
        %v1652 = vld [vmem:[%s1644 + $0x38] sm:$0xff]
        %v1653 = vrot.slane %v1434, 2
        %v1654 = vsel %vm810, %v1653, 0
        %1656 = vmatpush.msra.mxu0 0.0
        %1657 = vmatpush.msra.mxu0 0.0
        %1658 = vmatpush.msra.mxu0 0.0
        %1659 = vmatpush.msra.mxu0 0.0
        %1660 = vmatpush.msra.mxu0 0.0
        %1661 = vmatpush.msra.mxu0 0.0
        %1662 = vmatpush.msra.mxu0 0.0
        %1663 = vmatpush.msra.mxu0 0.0
        %1664 = vmatpush.msra.mxu0 0.0
        %1665 = vmatpush.msra.mxu0 0.0
        %1666 = vmatpush.msra.mxu0 0.0
        %1667 = vmatpush.msra.mxu0 0.0
        %1668 = vmatpush.msra.mxu0 0.0
        %1669 = vmatpush.msra.mxu0 0.0
        %1670 = vmatpush.msra.mxu0 %v1649
        %1671 = vmatpush.msra.mxu0 %v1645
        %1672 = vmatmul.f32.gmra.mxu0 %v1654
        %v1673 = vpop.f32.mrf.mxu0
        %v1674 = vadd.f32 0.0, %v1673
        %1675 = vdwg.mxu0
        %1676 = vmatpush.msra.mxu0 0.0
        %1677 = vmatpush.msra.mxu0 0.0
        %1678 = vmatpush.msra.mxu0 0.0
        %1679 = vmatpush.msra.mxu0 0.0
        %1680 = vmatpush.msra.mxu0 0.0
        %1681 = vmatpush.msra.mxu0 0.0
        %1682 = vmatpush.msra.mxu0 0.0
        %1683 = vmatpush.msra.mxu0 0.0
        %1684 = vmatpush.msra.mxu0 0.0
        %1685 = vmatpush.msra.mxu0 0.0
        %1686 = vmatpush.msra.mxu0 0.0
        %1687 = vmatpush.msra.mxu0 0.0
        %1688 = vmatpush.msra.mxu0 0.0
        %1689 = vmatpush.msra.mxu0 0.0
        %1690 = vmatpush.msra.mxu0 %v1650
        %1691 = vmatpush.msra.mxu0 %v1646
        %1692 = vmatmul.f32.gmra.mxu0 %v1654
        %v1693 = vpop.f32.mrf.mxu0
        %v1694 = vadd.f32 0.0, %v1693
        %1695 = vdwg.mxu0
        %1696 = vmatpush.msra.mxu0 0.0
        %1697 = vmatpush.msra.mxu0 0.0
        %1698 = vmatpush.msra.mxu0 0.0
        %1699 = vmatpush.msra.mxu0 0.0
        %1700 = vmatpush.msra.mxu0 0.0
        %1701 = vmatpush.msra.mxu0 0.0
        %1702 = vmatpush.msra.mxu0 0.0
        %1703 = vmatpush.msra.mxu0 0.0
        %1704 = vmatpush.msra.mxu0 0.0
        %1705 = vmatpush.msra.mxu0 0.0
        %1706 = vmatpush.msra.mxu0 0.0
        %1707 = vmatpush.msra.mxu0 0.0
        %1708 = vmatpush.msra.mxu0 0.0
        %1709 = vmatpush.msra.mxu0 0.0
        %1710 = vmatpush.msra.mxu0 %v1651
        %1711 = vmatpush.msra.mxu0 %v1647
        %1712 = vmatmul.f32.gmra.mxu0 %v1654
        %v1713 = vpop.f32.mrf.mxu0
        %v1714 = vadd.f32 0.0, %v1713
        %1715 = vdwg.mxu0
        %1716 = vmatpush.msra.mxu0 0.0
        %1717 = vmatpush.msra.mxu0 0.0
        %1718 = vmatpush.msra.mxu0 0.0
        %1719 = vmatpush.msra.mxu0 0.0
        %1720 = vmatpush.msra.mxu0 0.0
        %1721 = vmatpush.msra.mxu0 0.0
        %1722 = vmatpush.msra.mxu0 0.0
        %1723 = vmatpush.msra.mxu0 0.0
        %1724 = vmatpush.msra.mxu0 0.0
        %1725 = vmatpush.msra.mxu0 0.0
        %1726 = vmatpush.msra.mxu0 0.0
        %1727 = vmatpush.msra.mxu0 0.0
        %1728 = vmatpush.msra.mxu0 0.0
        %1729 = vmatpush.msra.mxu0 0.0
        %1730 = vmatpush.msra.mxu0 %v1652
        %1731 = vmatpush.msra.mxu0 %v1648
        %1732 = vmatmul.f32.gmra.mxu0 %v1654
        %v1733 = vpop.f32.mrf.mxu0
        %v1734 = vadd.f32 0.0, %v1733
        %1735 = vdwg.mxu0
        %v1740 = vrot.slane %v1694, 7
        %v1741 = vrot.slane %v1714, 6
        %v1742 = vrot.slane %v1734, 5
        %v1743 = vsel %vm711, %v1674, %v1740
        %v1744 = vsel %vm1535, %v1741, %v1742
        %v1745 = vsel %vm666, %v1743, %v1744
        %v1747 = vadd.f32 %v1643, %v1745
        %s1748 = scalar_lea.vmem %s7, 192
        %v1749 = vld [vmem:[%s1748] sm:$0xff]
        %v1750 = vld [vmem:[%s1748 + $0x8] sm:$0xff]
        %v1751 = vld [vmem:[%s1748 + $0x10] sm:$0xff]
        %v1752 = vld [vmem:[%s1748 + $0x18] sm:$0xff]
        %v1753 = vld [vmem:[%s1748 + $0x20] sm:$0xff]
        %v1754 = vld [vmem:[%s1748 + $0x28] sm:$0xff]
        %v1755 = vld [vmem:[%s1748 + $0x30] sm:$0xff]
        %v1756 = vld [vmem:[%s1748 + $0x38] sm:$0xff]
        %v1757 = vrot.slane %v1434, 3
        %v1758 = vsel %vm810, %v1757, 0
        %1760 = vmatpush.msra.mxu0 0.0
        %1761 = vmatpush.msra.mxu0 0.0
        %1762 = vmatpush.msra.mxu0 0.0
        %1763 = vmatpush.msra.mxu0 0.0
        %1764 = vmatpush.msra.mxu0 0.0
        %1765 = vmatpush.msra.mxu0 0.0
        %1766 = vmatpush.msra.mxu0 0.0
        %1767 = vmatpush.msra.mxu0 0.0
        %1768 = vmatpush.msra.mxu0 0.0
        %1769 = vmatpush.msra.mxu0 0.0
        %1770 = vmatpush.msra.mxu0 0.0
        %1771 = vmatpush.msra.mxu0 0.0
        %1772 = vmatpush.msra.mxu0 0.0
        %1773 = vmatpush.msra.mxu0 0.0
        %1774 = vmatpush.msra.mxu0 %v1753
        %1775 = vmatpush.msra.mxu0 %v1749
        %1776 = vmatmul.f32.gmra.mxu0 %v1758
        %v1777 = vpop.f32.mrf.mxu0
        %v1778 = vadd.f32 0.0, %v1777
        %1779 = vdwg.mxu0
        %1780 = vmatpush.msra.mxu0 0.0
        %1781 = vmatpush.msra.mxu0 0.0
        %1782 = vmatpush.msra.mxu0 0.0
        %1783 = vmatpush.msra.mxu0 0.0
        %1784 = vmatpush.msra.mxu0 0.0
        %1785 = vmatpush.msra.mxu0 0.0
        %1786 = vmatpush.msra.mxu0 0.0
        %1787 = vmatpush.msra.mxu0 0.0
        %1788 = vmatpush.msra.mxu0 0.0
        %1789 = vmatpush.msra.mxu0 0.0
        %1790 = vmatpush.msra.mxu0 0.0
        %1791 = vmatpush.msra.mxu0 0.0
        %1792 = vmatpush.msra.mxu0 0.0
        %1793 = vmatpush.msra.mxu0 0.0
        %1794 = vmatpush.msra.mxu0 %v1754
        %1795 = vmatpush.msra.mxu0 %v1750
        %1796 = vmatmul.f32.gmra.mxu0 %v1758
        %v1797 = vpop.f32.mrf.mxu0
        %v1798 = vadd.f32 0.0, %v1797
        %1799 = vdwg.mxu0
        %1800 = vmatpush.msra.mxu0 0.0
        %1801 = vmatpush.msra.mxu0 0.0
        %1802 = vmatpush.msra.mxu0 0.0
        %1803 = vmatpush.msra.mxu0 0.0
        %1804 = vmatpush.msra.mxu0 0.0
        %1805 = vmatpush.msra.mxu0 0.0
        %1806 = vmatpush.msra.mxu0 0.0
        %1807 = vmatpush.msra.mxu0 0.0
        %1808 = vmatpush.msra.mxu0 0.0
        %1809 = vmatpush.msra.mxu0 0.0
        %1810 = vmatpush.msra.mxu0 0.0
        %1811 = vmatpush.msra.mxu0 0.0
        %1812 = vmatpush.msra.mxu0 0.0
        %1813 = vmatpush.msra.mxu0 0.0
        %1814 = vmatpush.msra.mxu0 %v1755
        %1815 = vmatpush.msra.mxu0 %v1751
        %1816 = vmatmul.f32.gmra.mxu0 %v1758
        %v1817 = vpop.f32.mrf.mxu0
        %v1818 = vadd.f32 0.0, %v1817
        %1819 = vdwg.mxu0
        %1820 = vmatpush.msra.mxu0 0.0
        %1821 = vmatpush.msra.mxu0 0.0
        %1822 = vmatpush.msra.mxu0 0.0
        %1823 = vmatpush.msra.mxu0 0.0
        %1824 = vmatpush.msra.mxu0 0.0
        %1825 = vmatpush.msra.mxu0 0.0
        %1826 = vmatpush.msra.mxu0 0.0
        %1827 = vmatpush.msra.mxu0 0.0
        %1828 = vmatpush.msra.mxu0 0.0
        %1829 = vmatpush.msra.mxu0 0.0
        %1830 = vmatpush.msra.mxu0 0.0
        %1831 = vmatpush.msra.mxu0 0.0
        %1832 = vmatpush.msra.mxu0 0.0
        %1833 = vmatpush.msra.mxu0 0.0
        %1834 = vmatpush.msra.mxu0 %v1756
        %1835 = vmatpush.msra.mxu0 %v1752
        %1836 = vmatmul.f32.gmra.mxu0 %v1758
        %v1837 = vpop.f32.mrf.mxu0
        %v1838 = vadd.f32 0.0, %v1837
        %1839 = vdwg.mxu0
        %v1844 = vrot.slane %v1798, 7
        %v1845 = vrot.slane %v1818, 6
        %v1846 = vrot.slane %v1838, 5
        %v1847 = vsel %vm711, %v1778, %v1844
        %v1848 = vsel %vm1535, %v1845, %v1846
        %v1849 = vsel %vm666, %v1847, %v1848
        %v1851 = vadd.f32 %v1747, %v1849
        %s1852 = scalar_lea.vmem %s7, 256
        %v1853 = vld [vmem:[%s1852] sm:$0xff]
        %v1854 = vld [vmem:[%s1852 + $0x8] sm:$0xff]
        %v1855 = vld [vmem:[%s1852 + $0x10] sm:$0xff]
        %v1856 = vld [vmem:[%s1852 + $0x18] sm:$0xff]
        %v1857 = vld [vmem:[%s1852 + $0x20] sm:$0xff]
        %v1858 = vld [vmem:[%s1852 + $0x28] sm:$0xff]
        %v1859 = vld [vmem:[%s1852 + $0x30] sm:$0xff]
        %v1860 = vld [vmem:[%s1852 + $0x38] sm:$0xff]
        %v1861 = vrot.slane %v1434, 4
        %v1862 = vsel %vm810, %v1861, 0
        %1864 = vmatpush.msra.mxu0 0.0
        %1865 = vmatpush.msra.mxu0 0.0
        %1866 = vmatpush.msra.mxu0 0.0
        %1867 = vmatpush.msra.mxu0 0.0
        %1868 = vmatpush.msra.mxu0 0.0
        %1869 = vmatpush.msra.mxu0 0.0
        %1870 = vmatpush.msra.mxu0 0.0
        %1871 = vmatpush.msra.mxu0 0.0
        %1872 = vmatpush.msra.mxu0 0.0
        %1873 = vmatpush.msra.mxu0 0.0
        %1874 = vmatpush.msra.mxu0 0.0
        %1875 = vmatpush.msra.mxu0 0.0
        %1876 = vmatpush.msra.mxu0 0.0
        %1877 = vmatpush.msra.mxu0 0.0
        %1878 = vmatpush.msra.mxu0 %v1857
        %1879 = vmatpush.msra.mxu0 %v1853
        %1880 = vmatmul.f32.gmra.mxu0 %v1862
        %v1881 = vpop.f32.mrf.mxu0
        %v1882 = vadd.f32 0.0, %v1881
        %1883 = vdwg.mxu0
        %1884 = vmatpush.msra.mxu0 0.0
        %1885 = vmatpush.msra.mxu0 0.0
        %1886 = vmatpush.msra.mxu0 0.0
        %1887 = vmatpush.msra.mxu0 0.0
        %1888 = vmatpush.msra.mxu0 0.0
        %1889 = vmatpush.msra.mxu0 0.0
        %1890 = vmatpush.msra.mxu0 0.0
        %1891 = vmatpush.msra.mxu0 0.0
        %1892 = vmatpush.msra.mxu0 0.0
        %1893 = vmatpush.msra.mxu0 0.0
        %1894 = vmatpush.msra.mxu0 0.0
        %1895 = vmatpush.msra.mxu0 0.0
        %1896 = vmatpush.msra.mxu0 0.0
        %1897 = vmatpush.msra.mxu0 0.0
        %1898 = vmatpush.msra.mxu0 %v1858
        %1899 = vmatpush.msra.mxu0 %v1854
        %1900 = vmatmul.f32.gmra.mxu0 %v1862
        %v1901 = vpop.f32.mrf.mxu0
        %v1902 = vadd.f32 0.0, %v1901
        %1903 = vdwg.mxu0
        %1904 = vmatpush.msra.mxu0 0.0
        %1905 = vmatpush.msra.mxu0 0.0
        %1906 = vmatpush.msra.mxu0 0.0
        %1907 = vmatpush.msra.mxu0 0.0
        %1908 = vmatpush.msra.mxu0 0.0
        %1909 = vmatpush.msra.mxu0 0.0
        %1910 = vmatpush.msra.mxu0 0.0
        %1911 = vmatpush.msra.mxu0 0.0
        %1912 = vmatpush.msra.mxu0 0.0
        %1913 = vmatpush.msra.mxu0 0.0
        %1914 = vmatpush.msra.mxu0 0.0
        %1915 = vmatpush.msra.mxu0 0.0
        %1916 = vmatpush.msra.mxu0 0.0
        %1917 = vmatpush.msra.mxu0 0.0
        %1918 = vmatpush.msra.mxu0 %v1859
        %1919 = vmatpush.msra.mxu0 %v1855
        %1920 = vmatmul.f32.gmra.mxu0 %v1862
        %v1921 = vpop.f32.mrf.mxu0
        %v1922 = vadd.f32 0.0, %v1921
        %1923 = vdwg.mxu0
        %1924 = vmatpush.msra.mxu0 0.0
        %1925 = vmatpush.msra.mxu0 0.0
        %1926 = vmatpush.msra.mxu0 0.0
        %1927 = vmatpush.msra.mxu0 0.0
        %1928 = vmatpush.msra.mxu0 0.0
        %1929 = vmatpush.msra.mxu0 0.0
        %1930 = vmatpush.msra.mxu0 0.0
        %1931 = vmatpush.msra.mxu0 0.0
        %1932 = vmatpush.msra.mxu0 0.0
        %1933 = vmatpush.msra.mxu0 0.0
        %1934 = vmatpush.msra.mxu0 0.0
        %1935 = vmatpush.msra.mxu0 0.0
        %1936 = vmatpush.msra.mxu0 0.0
        %1937 = vmatpush.msra.mxu0 0.0
        %1938 = vmatpush.msra.mxu0 %v1860
        %1939 = vmatpush.msra.mxu0 %v1856
        %1940 = vmatmul.f32.gmra.mxu0 %v1862
        %v1941 = vpop.f32.mrf.mxu0
        %v1942 = vadd.f32 0.0, %v1941
        %1943 = vdwg.mxu0
        %v1948 = vrot.slane %v1902, 7
        %v1949 = vrot.slane %v1922, 6
        %v1950 = vrot.slane %v1942, 5
        %v1951 = vsel %vm711, %v1882, %v1948
        %v1952 = vsel %vm1535, %v1949, %v1950
        %v1953 = vsel %vm666, %v1951, %v1952
        %v1955 = vadd.f32 %v1851, %v1953
        %s1956 = scalar_lea.vmem %s7, 320
        %v1957 = vld [vmem:[%s1956] sm:$0xff]
        %v1958 = vld [vmem:[%s1956 + $0x8] sm:$0xff]
        %v1959 = vld [vmem:[%s1956 + $0x10] sm:$0xff]
        %v1960 = vld [vmem:[%s1956 + $0x18] sm:$0xff]
        %v1961 = vld [vmem:[%s1956 + $0x20] sm:$0xff]
        %v1962 = vld [vmem:[%s1956 + $0x28] sm:$0xff]
        %v1963 = vld [vmem:[%s1956 + $0x30] sm:$0xff]
        %v1964 = vld [vmem:[%s1956 + $0x38] sm:$0xff]
        %v1965 = vrot.slane %v1434, 5
        %v1966 = vsel %vm810, %v1965, 0
        %1968 = vmatpush.msra.mxu0 0.0
        %1969 = vmatpush.msra.mxu0 0.0
        %1970 = vmatpush.msra.mxu0 0.0
        %1971 = vmatpush.msra.mxu0 0.0
        %1972 = vmatpush.msra.mxu0 0.0
        %1973 = vmatpush.msra.mxu0 0.0
        %1974 = vmatpush.msra.mxu0 0.0
        %1975 = vmatpush.msra.mxu0 0.0
        %1976 = vmatpush.msra.mxu0 0.0
        %1977 = vmatpush.msra.mxu0 0.0
        %1978 = vmatpush.msra.mxu0 0.0
        %1979 = vmatpush.msra.mxu0 0.0
        %1980 = vmatpush.msra.mxu0 0.0
        %1981 = vmatpush.msra.mxu0 0.0
        %1982 = vmatpush.msra.mxu0 %v1961
        %1983 = vmatpush.msra.mxu0 %v1957
        %1984 = vmatmul.f32.gmra.mxu0 %v1966
        %v1985 = vpop.f32.mrf.mxu0
        %v1986 = vadd.f32 0.0, %v1985
        %1987 = vdwg.mxu0
        %1988 = vmatpush.msra.mxu0 0.0
        %1989 = vmatpush.msra.mxu0 0.0
        %1990 = vmatpush.msra.mxu0 0.0
        %1991 = vmatpush.msra.mxu0 0.0
        %1992 = vmatpush.msra.mxu0 0.0
        %1993 = vmatpush.msra.mxu0 0.0
        %1994 = vmatpush.msra.mxu0 0.0
        %1995 = vmatpush.msra.mxu0 0.0
        %1996 = vmatpush.msra.mxu0 0.0
        %1997 = vmatpush.msra.mxu0 0.0
        %1998 = vmatpush.msra.mxu0 0.0
        %1999 = vmatpush.msra.mxu0 0.0
        %2000 = vmatpush.msra.mxu0 0.0
        %2001 = vmatpush.msra.mxu0 0.0
        %2002 = vmatpush.msra.mxu0 %v1962
        %2003 = vmatpush.msra.mxu0 %v1958
        %2004 = vmatmul.f32.gmra.mxu0 %v1966
        %v2005 = vpop.f32.mrf.mxu0
        %v2006 = vadd.f32 0.0, %v2005
        %2007 = vdwg.mxu0
        %2008 = vmatpush.msra.mxu0 0.0
        %2009 = vmatpush.msra.mxu0 0.0
        %2010 = vmatpush.msra.mxu0 0.0
        %2011 = vmatpush.msra.mxu0 0.0
        %2012 = vmatpush.msra.mxu0 0.0
        %2013 = vmatpush.msra.mxu0 0.0
        %2014 = vmatpush.msra.mxu0 0.0
        %2015 = vmatpush.msra.mxu0 0.0
        %2016 = vmatpush.msra.mxu0 0.0
        %2017 = vmatpush.msra.mxu0 0.0
        %2018 = vmatpush.msra.mxu0 0.0
        %2019 = vmatpush.msra.mxu0 0.0
        %2020 = vmatpush.msra.mxu0 0.0
        %2021 = vmatpush.msra.mxu0 0.0
        %2022 = vmatpush.msra.mxu0 %v1963
        %2023 = vmatpush.msra.mxu0 %v1959
        %2024 = vmatmul.f32.gmra.mxu0 %v1966
        %v2025 = vpop.f32.mrf.mxu0
        %v2026 = vadd.f32 0.0, %v2025
        %2027 = vdwg.mxu0
        %2028 = vmatpush.msra.mxu0 0.0
        %2029 = vmatpush.msra.mxu0 0.0
        %2030 = vmatpush.msra.mxu0 0.0
        %2031 = vmatpush.msra.mxu0 0.0
        %2032 = vmatpush.msra.mxu0 0.0
        %2033 = vmatpush.msra.mxu0 0.0
        %2034 = vmatpush.msra.mxu0 0.0
        %2035 = vmatpush.msra.mxu0 0.0
        %2036 = vmatpush.msra.mxu0 0.0
        %2037 = vmatpush.msra.mxu0 0.0
        %2038 = vmatpush.msra.mxu0 0.0
        %2039 = vmatpush.msra.mxu0 0.0
        %2040 = vmatpush.msra.mxu0 0.0
        %2041 = vmatpush.msra.mxu0 0.0
        %2042 = vmatpush.msra.mxu0 %v1964
        %2043 = vmatpush.msra.mxu0 %v1960
        %2044 = vmatmul.f32.gmra.mxu0 %v1966
        %v2045 = vpop.f32.mrf.mxu0
        %v2046 = vadd.f32 0.0, %v2045
        %2047 = vdwg.mxu0
        %v2052 = vrot.slane %v2006, 7
        %v2053 = vrot.slane %v2026, 6
        %v2054 = vrot.slane %v2046, 5
        %v2055 = vsel %vm711, %v1986, %v2052
        %v2056 = vsel %vm1535, %v2053, %v2054
        %v2057 = vsel %vm666, %v2055, %v2056
        %v2059 = vadd.f32 %v1955, %v2057
        %v2060 = vmax.f32 %v2059, 0.0
        %v2061 = vld [vmem:[%s9] sm:$0xff]
        %v2062 = vld [vmem:[%s9 + $0x8] sm:$0xff]
        %v2063 = vld [vmem:[%s9 + $0x10] sm:$0xff]
        %v2064 = vld [vmem:[%s9 + $0x18] sm:$0xff]
        %v2065 = vld [vmem:[%s9 + $0x20] sm:$0xff]
        %v2066 = vld [vmem:[%s9 + $0x28] sm:$0xff]
        %v2067 = vld [vmem:[%s9 + $0x30] sm:$0xff]
        %v2068 = vld [vmem:[%s9 + $0x38] sm:$0xff]
        %v2069 = vld [vmem:[%s9 + $0x40] sm:$0xff]
        %v2070 = vld [vmem:[%s9 + $0x48] sm:$0xff]
        %v2071 = vld [vmem:[%s9 + $0x50] sm:$0xff]
        %v2072 = vld [vmem:[%s9 + $0x58] sm:$0xff]
        %v2073 = vld [vmem:[%s9 + $0x60] sm:$0xff]
        %v2074 = vld [vmem:[%s9 + $0x68] sm:$0xff]
        %v2075 = vld [vmem:[%s9 + $0x70] sm:$0xff]
        %v2076 = vld [vmem:[%s9 + $0x78] sm:$0xff]
        %v2077 = vld [vmem:[%s9 + $0x80] sm:$0xff]
        %v2078 = vld [vmem:[%s9 + $0x88] sm:$0xff]
        %v2079 = vld [vmem:[%s9 + $0x90] sm:$0xff]
        %v2080 = vld [vmem:[%s9 + $0x98] sm:$0xff]
        %v2081 = vld [vmem:[%s9 + $0xa0] sm:$0xff]
        %v2082 = vld [vmem:[%s9 + $0xa8] sm:$0xff]
        %v2083 = vld [vmem:[%s9 + $0xb0] sm:$0xff]
        %v2084 = vld [vmem:[%s9 + $0xb8] sm:$0xff]
        %v2085 = vld [vmem:[%s9 + $0xc0] sm:$0xff]
        %v2086 = vld [vmem:[%s9 + $0xc8] sm:$0xff]
        %v2087 = vld [vmem:[%s9 + $0xd0] sm:$0xff]
        %v2088 = vld [vmem:[%s9 + $0xd8] sm:$0xff]
        %v2089 = vld [vmem:[%s9 + $0xe0] sm:$0xff]
        %v2090 = vld [vmem:[%s9 + $0xe8] sm:$0xff]
        %v2091 = vld [vmem:[%s9 + $0xf0] sm:$0xff]
        %v2092 = vld [vmem:[%s9 + $0xf8] sm:$0xff]
        %v2093 = vld [vmem:[%s9 + $0x100] sm:$0xff]
        %v2094 = vld [vmem:[%s9 + $0x108] sm:$0xff]
        %v2095 = vld [vmem:[%s9 + $0x110] sm:$0xff]
        %v2096 = vld [vmem:[%s9 + $0x118] sm:$0xff]
        %v2097 = vld [vmem:[%s9 + $0x120] sm:$0xff]
        %v2098 = vld [vmem:[%s9 + $0x128] sm:$0xff]
        %v2099 = vld [vmem:[%s9 + $0x130] sm:$0xff]
        %v2100 = vld [vmem:[%s9 + $0x138] sm:$0xff]
        %v2101 = vld [vmem:[%s9 + $0x140] sm:$0xff]
        %v2102 = vld [vmem:[%s9 + $0x148] sm:$0xff]
        %v2103 = vld [vmem:[%s9 + $0x150] sm:$0xff]
        %v2104 = vld [vmem:[%s9 + $0x158] sm:$0xff]
        %v2105 = vld [vmem:[%s9 + $0x160] sm:$0xff]
        %v2106 = vld [vmem:[%s9 + $0x168] sm:$0xff]
        %v2107 = vld [vmem:[%s9 + $0x170] sm:$0xff]
        %v2108 = vld [vmem:[%s9 + $0x178] sm:$0xff]
        %v2109 = vld [vmem:[%s9 + $0x180] sm:$0xff]
        %v2110 = vld [vmem:[%s9 + $0x188] sm:$0xff]
        %v2111 = vld [vmem:[%s9 + $0x190] sm:$0xff]
        %v2112 = vld [vmem:[%s9 + $0x198] sm:$0xff]
        %v2113 = vld [vmem:[%s9 + $0x1a0] sm:$0xff]
        %v2114 = vld [vmem:[%s9 + $0x1a8] sm:$0xff]
        %v2115 = vld [vmem:[%s9 + $0x1b0] sm:$0xff]
        %v2116 = vld [vmem:[%s10] sm:$0x1]
        %v2118 = vperm.slane %v2060, 0
        %v2119 = vperm.slane %v2060, 1
        %v2120 = vperm.slane %v2060, 2
        %v2121 = vperm.slane %v2060, 3
        %vm2125 = vcmask 457728
        %v2126 = vsel %vm2125, %v2121, 0
        %2128 = vmatpush.msra.mxu0 %v2076
        %2129 = vmatpush.msra.mxu0 %v2075
        %2130 = vmatpush.msra.mxu0 %v2074
        %2131 = vmatpush.msra.mxu0 %v2073
        %2132 = vmatpush.msra.mxu0 %v2072
        %2133 = vmatpush.msra.mxu0 %v2071
        %2134 = vmatpush.msra.mxu0 %v2070
        %2135 = vmatpush.msra.mxu0 %v2069
        %2136 = vmatpush.msra.mxu0 %v2068
        %2137 = vmatpush.msra.mxu0 %v2067
        %2138 = vmatpush.msra.mxu0 %v2066
        %2139 = vmatpush.msra.mxu0 %v2065
        %2140 = vmatpush.msra.mxu0 %v2064
        %2141 = vmatpush.msra.mxu0 %v2063
        %2142 = vmatpush.msra.mxu0 %v2062
        %2143 = vmatpush.msra.mxu0 %v2061
        %2144 = vmatmul.f32.gmra.mxu0 %v2118
        %v2145 = vpop.f32.mrf.mxu0
        %v2146 = vadd.f32 %v2116, %v2145
        %2147 = vdwg.mxu0
        %2148 = vmatpush.msra.mxu0 %v2092
        %2149 = vmatpush.msra.mxu0 %v2091
        %2150 = vmatpush.msra.mxu0 %v2090
        %2151 = vmatpush.msra.mxu0 %v2089
        %2152 = vmatpush.msra.mxu0 %v2088
        %2153 = vmatpush.msra.mxu0 %v2087
        %2154 = vmatpush.msra.mxu0 %v2086
        %2155 = vmatpush.msra.mxu0 %v2085
        %2156 = vmatpush.msra.mxu0 %v2084
        %2157 = vmatpush.msra.mxu0 %v2083
        %2158 = vmatpush.msra.mxu0 %v2082
        %2159 = vmatpush.msra.mxu0 %v2081
        %2160 = vmatpush.msra.mxu0 %v2080
        %2161 = vmatpush.msra.mxu0 %v2079
        %2162 = vmatpush.msra.mxu0 %v2078
        %2163 = vmatpush.msra.mxu0 %v2077
        %2164 = vmatmul.f32.gmra.mxu0 %v2119
        %v2165 = vpop.f32.mrf.mxu0
        %v2166 = vadd.f32 %v2146, %v2165
        %2167 = vdwg.mxu0
        %2168 = vmatpush.msra.mxu0 %v2108
        %2169 = vmatpush.msra.mxu0 %v2107
        %2170 = vmatpush.msra.mxu0 %v2106
        %2171 = vmatpush.msra.mxu0 %v2105
        %2172 = vmatpush.msra.mxu0 %v2104
        %2173 = vmatpush.msra.mxu0 %v2103
        %2174 = vmatpush.msra.mxu0 %v2102
        %2175 = vmatpush.msra.mxu0 %v2101
        %2176 = vmatpush.msra.mxu0 %v2100
        %2177 = vmatpush.msra.mxu0 %v2099
        %2178 = vmatpush.msra.mxu0 %v2098
        %2179 = vmatpush.msra.mxu0 %v2097
        %2180 = vmatpush.msra.mxu0 %v2096
        %2181 = vmatpush.msra.mxu0 %v2095
        %2182 = vmatpush.msra.mxu0 %v2094
        %2183 = vmatpush.msra.mxu0 %v2093
        %2184 = vmatmul.f32.gmra.mxu0 %v2120
        %v2185 = vpop.f32.mrf.mxu0
        %v2186 = vadd.f32 %v2166, %v2185
        %2187 = vdwg.mxu0
        %2188 = vmatpush.msra.mxu0 0.0
        %2189 = vmatpush.msra.mxu0 0.0
        %2190 = vmatpush.msra.mxu0 0.0
        %2191 = vmatpush.msra.mxu0 0.0
        %2192 = vmatpush.msra.mxu0 0.0
        %2193 = vmatpush.msra.mxu0 0.0
        %2194 = vmatpush.msra.mxu0 0.0
        %2195 = vmatpush.msra.mxu0 0.0
        %2196 = vmatpush.msra.mxu0 0.0
        %2197 = vmatpush.msra.mxu0 %v2115
        %2198 = vmatpush.msra.mxu0 %v2114
        %2199 = vmatpush.msra.mxu0 %v2113
        %2200 = vmatpush.msra.mxu0 %v2112
        %2201 = vmatpush.msra.mxu0 %v2111
        %2202 = vmatpush.msra.mxu0 %v2110
        %2203 = vmatpush.msra.mxu0 %v2109
        %2204 = vmatmul.f32.gmra.mxu0 %v2126
        %v2205 = vpop.f32.mrf.mxu0
        %v2206 = vadd.f32 %v2186, %v2205
        %2207 = vdwg.mxu0
        %vm2208 = vcmask 253952
        %2209 = vst.msk [vmem:[%s399] sm:$0x1] %vm2208, %v2206
        %p2210 = scmp.lt.s32.totalorder %s23, 1
        %s2211 = scalar_select %p2210, %s23, 1
        %s2212 = scalar_lea.vmem %s11, %s2211
        // Predicated region
        $region69: #{cnn_encoder_forward.1} parent=63 // pred_check
          %p2213 = pneg %p277
        $region70: #{cnn_encoder_forward.1} parent=63 // pred_check_branch
          %2215 = sbr.rel (%p2213) target = $region72
        $region71: #{cnn_encoder_forward.1} parent=63 // pred_region
          _
        $region72: #{cnn_encoder_forward.1} parent=63 // pred_fallthru
          _
      $region64: #{cnn_encoder_forward.1} parent=5 // pred_fallthru
        _
      %p2216 = scmp.le.s32.totalorder 2, %s18
      // Predicated region
      $region73: #{cnn_encoder_forward.1} parent=5 // pred_check
        %p2217 = pneg %p2216
      $region74: #{cnn_encoder_forward.1} parent=5 // pred_check_branch
        %2219 = sbr.rel (%p2217) target = $region76
      $region75: #{cnn_encoder_forward.1} parent=5 // pred_region
        %s2220 = ssub.s32 %s18, 2
        // Predicated region
        $region77: #{cnn_encoder_forward.1} parent=75 // pred_check
          %p2221 = pneg %p283
        $region78: #{cnn_encoder_forward.1} parent=75 // pred_check_branch
          %2223 = sbr.rel (%p2221) target = $region80
        $region79: #{cnn_encoder_forward.1} parent=75 // pred_region
          %p2224 = scmp.lt.s32.totalorder %s24, 1
          %s2225 = scalar_select %p2224, %s24, 1
          %s2226 = scalar_lea.vmem %s11, %s2225
        $region80: #{cnn_encoder_forward.1} parent=75 // pred_fallthru
          _
      $region76: #{cnn_encoder_forward.1} parent=5 // pred_fallthru
        _
    $region6: #{cnn_encoder_forward.1} parent=1 // loop_footer
      %s22 = sadd.s32 1, %s18
    $region7: #{cnn_encoder_forward.1} parent=1 // loop_footer_branch
      %17 = sbr.rel target = $region3
    $region8: #{cnn_encoder_forward.1} parent=1 // loop_exit
      _
    %2227 = vsyncpa [#allocation3], 1
    %s2228 = scalar_lea.sflag [#allocation3], 1
    %2229 = vsyncpa %s2228, 1

</llo_original>
